<compile_context>
chip_gen: v5e
topology: v5e:2x2
jax: 0.10.0
libtpu: 0.0.40
codegen_flags: <defaults>
</compile_context>

<pallas_src>
import functools

import jax
import jax.numpy as jnp
from jax.experimental import pallas as pl
from jax.experimental.pallas import tpu as pltpu

EPS = 1e-5  # InstanceNorm2d default


# ---------------------------------------------------------------------------
# Kernel 1: conv (k*k accumulated MXU matmuls) + per-tile partial IN stats.
# ---------------------------------------------------------------------------
def _conv_stats_kernel(x_ref, w_ref, y_ref, st_ref, *, k, stride, tr, wpp, wo):
    # x_ref : (1, k, TR*Wpp, C_in) bf16  -- ky-shifted rows, full padded width
    # w_ref : (k, k, C_in, C_out)  bf16
    # y_ref : (1, TR, Wo, C_out)   f32   -- un-normalized conv output tile
    # st_ref: (1, 1, 2, C_out)     f32   -- per-tile (sum, sum_sq) over spatial
    c_out = w_ref.shape[-1]
    acc = jnp.zeros((tr, wo, c_out), jnp.float32)
    for ky in range(k):
        lhs = x_ref[0, ky]                                     # (TR*Wpp, C_in)
        for kx in range(k):
            yk = jnp.dot(lhs, w_ref[ky, kx],
                         preferred_element_type=jnp.float32)   # (TR*Wpp, C_out)
            yk = yk.reshape(tr, wpp, c_out)                    # Wpp % 8 == 0
            if stride == 1:
                acc = acc + yk[:, kx:kx + wo, :]
            else:
                acc = acc + jax.lax.slice(
                    yk, (0, kx, 0),
                    (tr, kx + stride * (wo - 1) + 1, c_out), (1, stride, 1))
    # Conv bias intentionally omitted: it is cancelled exactly by the
    # InstanceNorm mean subtraction (added back in wrapper if normalize=False).
    y_ref[0] = acc.astype(y_ref.dtype)
    psum = jnp.sum(acc, axis=(0, 1), keepdims=True)[0]         # (1, C_out)
    psq = jnp.sum(acc * acc, axis=(0, 1), keepdims=True)[0]    # (1, C_out)
    st_ref[0, 0, 0:1, :] = psum
    st_ref[0, 0, 1:2, :] = psq


# ---------------------------------------------------------------------------
# Kernel 2: y * scale + shift (folded InstanceNorm affine) + ReLU, written
# channel-major so stores are lane-dense and no NHWC->NCHW transpose is needed.
# ---------------------------------------------------------------------------
def _scale_shift_kernel(y_ref, sc_ref, sh_ref, o_ref, *, tr, wo, relu):
    # y_ref : (1, TR, Wo, C_out) f32 ; sc/sh_ref : (1, 1, C_out) f32
    # o_ref : (1, C_out, TR*Wo)  f32
    c_out = o_ref.shape[1]
    z = y_ref[0] * sc_ref[0] + sh_ref[0]
    if relu:
        z = jnp.maximum(z, 0.0)
    z2 = z.reshape(tr * wo, c_out)
    o_ref[0] = jnp.transpose(z2, (1, 0)).astype(o_ref.dtype)


def _pick_tile_rows(ho, wo, wpp, c_in, c_out, k, tile_rows=None):
    def ok(d):
        # Must divide Ho; channel-major output tile keeps a lane-dense
        # (multiple of 128) last dim unless the tile covers the whole sample.
        return ho % d == 0 and (d == ho or (d * wo) % 128 == 0)

    if tile_rows is not None:
        if not ok(tile_rows):
            raise ValueError(f"tile_rows={tile_rows} incompatible with "
                             f"Ho={ho}, Wo={wo}")
        return tile_rows
    budget = 8 * 1024 * 1024   # conservative per-tile budget (v7x-safe)
    for d in sorted((d for d in range(1, ho + 1) if ho % d == 0), reverse=True):
        if not ok(d):
            continue
        tile_bytes = d * (k * wpp * c_in * 2 + 2 * wo * c_out * 4)
        if 2 * tile_bytes <= budget:
            return d
    return ho


@functools.partial(jax.jit, static_argnames=(
    "kernel_size", "stride", "upsample", "normalize", "relu", "tile_rows"))
def conv_block_forward(x, weight, bias, gamma, beta, *, kernel_size, stride=1,
                       upsample=False, normalize=True, relu=True,
                       tile_rows=None):
    """x: (N, C_in, H, W) NCHW, weight: (C_out, C_in, k, k). Returns NCHW f32."""
    k = kernel_size
    pad = k // 2
    if upsample:
        x = jnp.repeat(jnp.repeat(x, 2, axis=2), 2, axis=3)  # nearest 2x

    n, c_in, h, w = x.shape
    c_out = weight.shape[0]

    # NHWC + reflection pad, then zero-pad width to a multiple of 8 so row
    # tiles stay sublane-aligned (padded cols are never selected by kx slices).
    xh = jnp.transpose(x, (0, 2, 3, 1))
    xh = jnp.pad(xh, ((0, 0), (pad, pad), (pad, pad), (0, 0)), mode="reflect")
    hp, wp = h + 2 * pad, w + 2 * pad
    ho = (hp - k) // stride + 1
    wo = (wp - k) // stride + 1
    wpp = ((wp + 7) // 8) * 8
    if wpp != wp:
        xh = jnp.pad(xh, ((0, 0), (0, 0), (0, wpp - wp), (0, 0)))

    # k row-shifted (and row-strided) views; kx shifts stay in-kernel.
    rows = [xh[:, ky:ky + stride * (ho - 1) + 1:stride, :, :] for ky in range(k)]
    xs = jnp.stack(rows, axis=1)                         # (N, k, Ho, Wpp, C_in)
    xs = xs.reshape(n, k, ho * wpp, c_in).astype(jnp.bfloat16)

    wm = jnp.transpose(weight, (2, 3, 1, 0)).astype(jnp.bfloat16)  # (k,k,Ci,Co)

    tr = _pick_tile_rows(ho, wo, wpp, c_in, c_out, k, tile_rows)
    n_tiles = ho // tr

    x_tile_b = k * tr * wpp * c_in * 2
    y_tile_b = tr * wo * c_out * 4
    vmem_limit = int(min(100 * 1024 * 1024,
                         max(32 * 1024 * 1024,
                             4 * (x_tile_b + 2 * y_tile_b) + (2 << 20))))

    conv_kernel = functools.partial(_conv_stats_kernel, k=k, stride=stride,
                                    tr=tr, wpp=wpp, wo=wo)
    y4, stats = pl.pallas_call(
        conv_kernel,
        out_shape=(jax.ShapeDtypeStruct((n, ho, wo, c_out), jnp.float32),
                   jax.ShapeDtypeStruct((n, n_tiles, 2, c_out), jnp.float32)),
        grid_spec=pltpu.PrefetchScalarGridSpec(
            num_scalar_prefetch=0,
            grid=(n, n_tiles),
            in_specs=[
                pl.BlockSpec((1, k, tr * wpp, c_in), lambda b, t: (b, 0, t, 0)),
                pl.BlockSpec((k, k, c_in, c_out), lambda b, t: (0, 0, 0, 0)),
            ],
            out_specs=[
                pl.BlockSpec((1, tr, wo, c_out), lambda b, t: (b, t, 0, 0)),
                pl.BlockSpec((1, 1, 2, c_out), lambda b, t: (b, t, 0, 0)),
            ],
        ),
        compiler_params=pltpu.CompilerParams(
            dimension_semantics=("parallel", "parallel"),
            vmem_limit_bytes=vmem_limit),
    )(xs, wm)

    # Finalize InstanceNorm stats (tiny) and fold gamma/beta/bias into one
    # per-(sample, channel) scale & shift.
    p_count = float(ho * wo)
    if normalize:
        sums = jnp.sum(stats, axis=1)                    # (N, 2, C_out)
        mean = sums[:, 0, :] / p_count
        var = sums[:, 1, :] / p_count - mean * mean      # biased, like PyTorch
        inv = jax.lax.rsqrt(var + EPS)
        scale = gamma[None, :] * inv
        shift = beta[None, :] - mean * scale
    else:
        scale = jnp.ones((n, c_out), jnp.float32)
        shift = jnp.broadcast_to(bias[None, :], (n, c_out))
    scale = scale.reshape(n, 1, c_out).astype(jnp.float32)
    shift = shift.reshape(n, 1, c_out).astype(jnp.float32)

    norm_kernel = functools.partial(_scale_shift_kernel, tr=tr, wo=wo, relu=relu)
    out_cm = pl.pallas_call(
        norm_kernel,
        out_shape=jax.ShapeDtypeStruct((n, c_out, ho * wo), jnp.float32),
        grid_spec=pltpu.PrefetchScalarGridSpec(
            num_scalar_prefetch=0,
            grid=(n, n_tiles),
            in_specs=[
                pl.BlockSpec((1, tr, wo, c_out), lambda b, t: (b, t, 0, 0)),
                pl.BlockSpec((1, 1, c_out), lambda b, t: (b, 0, 0)),
                pl.BlockSpec((1, 1, c_out), lambda b, t: (b, 0, 0)),
            ],
            out_specs=pl.BlockSpec((1, c_out, tr * wo), lambda b, t: (b, 0, t)),
        ),
        compiler_params=pltpu.CompilerParams(
            dimension_semantics=("parallel", "parallel"),
            vmem_limit_bytes=vmem_limit),
    )(y4, scale, shift)

    # Already channel-major: only a free reshape to NCHW, no transpose.
    return out_cm.reshape(n, c_out, ho, wo)


def _reference(x, weight, bias, gamma, beta, *, kernel_size, stride=1,
               upsample=False, normalize=True, relu=True):
    k = kernel_size
    if upsample:
        x = jnp.repeat(jnp.repeat(x, 2, axis=2), 2, axis=3)
    xp = jnp.pad(x, ((0, 0), (0, 0), (k // 2, k // 2), (k // 2, k // 2)),
                 mode="reflect")
    y = jax.lax.conv_general_dilated(
        xp, weight, (stride, stride), "VALID",
        dimension_numbers=("NCHW", "OIHW", "NCHW"))
    y = y + bias[None, :, None, None]
    if normalize:
        mean = jnp.mean(y, axis=(2, 3), keepdims=True)
        var = jnp.mean((y - mean) ** 2, axis=(2, 3), keepdims=True)
        y = (y - mean) * jax.lax.rsqrt(var + EPS)
        y = y * gamma[None, :, None, None] + beta[None, :, None, None]
    if relu:
        y = jnp.maximum(y, 0.0)
    return y


if __name__ == "__main__":
    # ConvBlock(in_channels=4, out_channels=8, kernel_size=3, stride=1,
    #           upsample=False, normalize=True, relu=True)
    N, C_in, H, W = 2, 4, 16, 16
    C_out, k, stride = 8, 3, 1

    key = jax.random.PRNGKey(0)
    kx, kw, kb, kg, kbe = jax.random.split(key, 5)
    x = jax.random.normal(kx, (N, C_in, H, W), dtype=jnp.float32)
    weight = 0.1 * jax.random.normal(kw, (C_out, C_in, k, k), dtype=jnp.float32)
    bias = 0.1 * jax.random.normal(kb, (C_out,), dtype=jnp.float32)
    gamma = 1.0 + 0.1 * jax.random.normal(kg, (C_out,), dtype=jnp.float32)
    beta = 0.1 * jax.random.normal(kbe, (C_out,), dtype=jnp.float32)

    # tile_rows=8 -> 2 spatial tiles per sample, exercising the tiled-stats path.
    y = conv_block_forward(x, weight, bias, gamma, beta,
                           kernel_size=k, stride=stride, upsample=False,
                           tile_rows=8)
    y = jax.block_until_ready(y)
    assert y.shape == (N, C_out, H, W), y.shape

    y_ref = _reference(x, weight, bias, gamma, beta,
                       kernel_size=k, stride=stride, upsample=False)
    err = float(jnp.max(jnp.abs(y - y_ref)))
    assert err < 1e-1, f"max abs error vs reference: {err}"
    print("KERNEL_OK")
</pallas_src>

<mosaic_0001>
module attributes {stable_mosaic.version = 11 : i64} {
  func.func @_conv_stats_kernel(%arg0: i32, %arg1: i32, %arg2: memref<1x3x192x4xbf16, #tpu.memory_space<vmem>>, %arg3: memref<3x3x4x8xbf16, #tpu.memory_space<vmem>>, %arg4: memref<1x8x16x8xf32, #tpu.memory_space<vmem>>, %arg5: memref<1x1x2x8xf32, #tpu.memory_space<vmem>>) attributes {dimension_semantics = [#tpu.dimension_semantics<parallel>, #tpu.dimension_semantics<parallel>], iteration_bounds = array<i64: 2, 2>, scalar_prefetch = 0 : i64, scratch_operands = 0 : i64, tpu.core_type = #tpu.core_type<tc>, window_params = [{transform_indices = @transform_0, window_bounds = array<i64: 1, 3, 192, 4>}, {pipeline_mode = #tpu.pipeline_mode<synchronous>, transform_indices = @transform_1, window_bounds = array<i64: 3, 3, 4, 8>}, {transform_indices = @transform_2, window_bounds = array<i64: 1, 8, 16, 8>}, {transform_indices = @transform_3, window_bounds = array<i64: 1, 1, 2, 8>}]} {
    %cst = arith.constant 0.000000e+00 : f32
    %0 = vector.broadcast %cst : f32 to vector<8x16x8xf32>
    %c0 = arith.constant 0 : index
    %c0_0 = arith.constant 0 : index
    %c0_1 = arith.constant 0 : index
    %c0_2 = arith.constant 0 : index
    %1 = vector.load %arg2[%c0, %c0_0, %c0_1, %c0_2] : memref<1x3x192x4xbf16, #tpu.memory_space<vmem>>, vector<1x1x192x4xbf16>
    %2 = vector.shape_cast %1 : vector<1x1x192x4xbf16> to vector<192x4xbf16>
    %c0_3 = arith.constant 0 : index
    %c0_4 = arith.constant 0 : index
    %c0_5 = arith.constant 0 : index
    %c0_6 = arith.constant 0 : index
    %3 = vector.load %arg3[%c0_3, %c0_4, %c0_5, %c0_6] : memref<3x3x4x8xbf16, #tpu.memory_space<vmem>>, vector<1x1x4x8xbf16>
    %4 = vector.shape_cast %3 : vector<1x1x4x8xbf16> to vector<4x8xbf16>
    %cst_7 = arith.constant dense<0.000000e+00> : vector<192x8xf32>
    %5 = tpu.matmul %2, %4, %cst_7 {dimension_numbers = #tpu.dot_dimension_numbers<[1], [0], [0], [1], [0, 0, 1, 1], [], []>} : vector<192x4xbf16>, vector<4x8xbf16>, vector<192x8xf32> -> vector<192x8xf32>
    %6 = vector.shape_cast %5 : vector<192x8xf32> to vector<8x24x8xf32>
    %7 = vector.extract_strided_slice %6 {offsets = [0, 0, 0], sizes = [8, 16, 8], strides = [1, 1, 1]} : vector<8x24x8xf32> to vector<8x16x8xf32>
    %8 = arith.addf %0, %7 : vector<8x16x8xf32>
    %c0_8 = arith.constant 0 : index
    %c1 = arith.constant 1 : index
    %c0_9 = arith.constant 0 : index
    %c0_10 = arith.constant 0 : index
    %9 = vector.load %arg3[%c0_8, %c1, %c0_9, %c0_10] : memref<3x3x4x8xbf16, #tpu.memory_space<vmem>>, vector<1x1x4x8xbf16>
    %10 = vector.shape_cast %9 : vector<1x1x4x8xbf16> to vector<4x8xbf16>
    %cst_11 = arith.constant dense<0.000000e+00> : vector<192x8xf32>
    %11 = tpu.matmul %2, %10, %cst_11 {dimension_numbers = #tpu.dot_dimension_numbers<[1], [0], [0], [1], [0, 0, 1, 1], [], []>} : vector<192x4xbf16>, vector<4x8xbf16>, vector<192x8xf32> -> vector<192x8xf32>
    %12 = vector.shape_cast %11 : vector<192x8xf32> to vector<8x24x8xf32>
    %13 = vector.extract_strided_slice %12 {offsets = [0, 1, 0], sizes = [8, 16, 8], strides = [1, 1, 1]} : vector<8x24x8xf32> to vector<8x16x8xf32>
    %14 = arith.addf %8, %13 : vector<8x16x8xf32>
    %c0_12 = arith.constant 0 : index
    %c2 = arith.constant 2 : index
    %c0_13 = arith.constant 0 : index
    %c0_14 = arith.constant 0 : index
    %15 = vector.load %arg3[%c0_12, %c2, %c0_13, %c0_14] : memref<3x3x4x8xbf16, #tpu.memory_space<vmem>>, vector<1x1x4x8xbf16>
    %16 = vector.shape_cast %15 : vector<1x1x4x8xbf16> to vector<4x8xbf16>
    %cst_15 = arith.constant dense<0.000000e+00> : vector<192x8xf32>
    %17 = tpu.matmul %2, %16, %cst_15 {dimension_numbers = #tpu.dot_dimension_numbers<[1], [0], [0], [1], [0, 0, 1, 1], [], []>} : vector<192x4xbf16>, vector<4x8xbf16>, vector<192x8xf32> -> vector<192x8xf32>
    %18 = vector.shape_cast %17 : vector<192x8xf32> to vector<8x24x8xf32>
    %19 = vector.extract_strided_slice %18 {offsets = [0, 2, 0], sizes = [8, 16, 8], strides = [1, 1, 1]} : vector<8x24x8xf32> to vector<8x16x8xf32>
    %20 = arith.addf %14, %19 : vector<8x16x8xf32>
    %c0_16 = arith.constant 0 : index
    %c1_17 = arith.constant 1 : index
    %c0_18 = arith.constant 0 : index
    %c0_19 = arith.constant 0 : index
    %21 = vector.load %arg2[%c0_16, %c1_17, %c0_18, %c0_19] : memref<1x3x192x4xbf16, #tpu.memory_space<vmem>>, vector<1x1x192x4xbf16>
    %22 = vector.shape_cast %21 : vector<1x1x192x4xbf16> to vector<192x4xbf16>
    %c1_20 = arith.constant 1 : index
    %c0_21 = arith.constant 0 : index
    %c0_22 = arith.constant 0 : index
    %c0_23 = arith.constant 0 : index
    %23 = vector.load %arg3[%c1_20, %c0_21, %c0_22, %c0_23] : memref<3x3x4x8xbf16, #tpu.memory_space<vmem>>, vector<1x1x4x8xbf16>
    %24 = vector.shape_cast %23 : vector<1x1x4x8xbf16> to vector<4x8xbf16>
    %cst_24 = arith.constant dense<0.000000e+00> : vector<192x8xf32>
    %25 = tpu.matmul %22, %24, %cst_24 {dimension_numbers = #tpu.dot_dimension_numbers<[1], [0], [0], [1], [0, 0, 1, 1], [], []>} : vector<192x4xbf16>, vector<4x8xbf16>, vector<192x8xf32> -> vector<192x8xf32>
    %26 = vector.shape_cast %25 : vector<192x8xf32> to vector<8x24x8xf32>
    %27 = vector.extract_strided_slice %26 {offsets = [0, 0, 0], sizes = [8, 16, 8], strides = [1, 1, 1]} : vector<8x24x8xf32> to vector<8x16x8xf32>
    %28 = arith.addf %20, %27 : vector<8x16x8xf32>
    %c1_25 = arith.constant 1 : index
    %c1_26 = arith.constant 1 : index
    %c0_27 = arith.constant 0 : index
    %c0_28 = arith.constant 0 : index
    %29 = vector.load %arg3[%c1_25, %c1_26, %c0_27, %c0_28] : memref<3x3x4x8xbf16, #tpu.memory_space<vmem>>, vector<1x1x4x8xbf16>
    %30 = vector.shape_cast %29 : vector<1x1x4x8xbf16> to vector<4x8xbf16>
    %cst_29 = arith.constant dense<0.000000e+00> : vector<192x8xf32>
    %31 = tpu.matmul %22, %30, %cst_29 {dimension_numbers = #tpu.dot_dimension_numbers<[1], [0], [0], [1], [0, 0, 1, 1], [], []>} : vector<192x4xbf16>, vector<4x8xbf16>, vector<192x8xf32> -> vector<192x8xf32>
    %32 = vector.shape_cast %31 : vector<192x8xf32> to vector<8x24x8xf32>
    %33 = vector.extract_strided_slice %32 {offsets = [0, 1, 0], sizes = [8, 16, 8], strides = [1, 1, 1]} : vector<8x24x8xf32> to vector<8x16x8xf32>
    %34 = arith.addf %28, %33 : vector<8x16x8xf32>
    %c1_30 = arith.constant 1 : index
    %c2_31 = arith.constant 2 : index
    %c0_32 = arith.constant 0 : index
    %c0_33 = arith.constant 0 : index
    %35 = vector.load %arg3[%c1_30, %c2_31, %c0_32, %c0_33] : memref<3x3x4x8xbf16, #tpu.memory_space<vmem>>, vector<1x1x4x8xbf16>
    %36 = vector.shape_cast %35 : vector<1x1x4x8xbf16> to vector<4x8xbf16>
    %cst_34 = arith.constant dense<0.000000e+00> : vector<192x8xf32>
    %37 = tpu.matmul %22, %36, %cst_34 {dimension_numbers = #tpu.dot_dimension_numbers<[1], [0], [0], [1], [0, 0, 1, 1], [], []>} : vector<192x4xbf16>, vector<4x8xbf16>, vector<192x8xf32> -> vector<192x8xf32>
    %38 = vector.shape_cast %37 : vector<192x8xf32> to vector<8x24x8xf32>
    %39 = vector.extract_strided_slice %38 {offsets = [0, 2, 0], sizes = [8, 16, 8], strides = [1, 1, 1]} : vector<8x24x8xf32> to vector<8x16x8xf32>
    %40 = arith.addf %34, %39 : vector<8x16x8xf32>
    %c0_35 = arith.constant 0 : index
    %c2_36 = arith.constant 2 : index
    %c0_37 = arith.constant 0 : index
    %c0_38 = arith.constant 0 : index
    %41 = vector.load %arg2[%c0_35, %c2_36, %c0_37, %c0_38] : memref<1x3x192x4xbf16, #tpu.memory_space<vmem>>, vector<1x1x192x4xbf16>
    %42 = vector.shape_cast %41 : vector<1x1x192x4xbf16> to vector<192x4xbf16>
    %c2_39 = arith.constant 2 : index
    %c0_40 = arith.constant 0 : index
    %c0_41 = arith.constant 0 : index
    %c0_42 = arith.constant 0 : index
    %43 = vector.load %arg3[%c2_39, %c0_40, %c0_41, %c0_42] : memref<3x3x4x8xbf16, #tpu.memory_space<vmem>>, vector<1x1x4x8xbf16>
    %44 = vector.shape_cast %43 : vector<1x1x4x8xbf16> to vector<4x8xbf16>
    %cst_43 = arith.constant dense<0.000000e+00> : vector<192x8xf32>
    %45 = tpu.matmul %42, %44, %cst_43 {dimension_numbers = #tpu.dot_dimension_numbers<[1], [0], [0], [1], [0, 0, 1, 1], [], []>} : vector<192x4xbf16>, vector<4x8xbf16>, vector<192x8xf32> -> vector<192x8xf32>
    %46 = vector.shape_cast %45 : vector<192x8xf32> to vector<8x24x8xf32>
    %47 = vector.extract_strided_slice %46 {offsets = [0, 0, 0], sizes = [8, 16, 8], strides = [1, 1, 1]} : vector<8x24x8xf32> to vector<8x16x8xf32>
    %48 = arith.addf %40, %47 : vector<8x16x8xf32>
    %c2_44 = arith.constant 2 : index
    %c1_45 = arith.constant 1 : index
    %c0_46 = arith.constant 0 : index
    %c0_47 = arith.constant 0 : index
    %49 = vector.load %arg3[%c2_44, %c1_45, %c0_46, %c0_47] : memref<3x3x4x8xbf16, #tpu.memory_space<vmem>>, vector<1x1x4x8xbf16>
    %50 = vector.shape_cast %49 : vector<1x1x4x8xbf16> to vector<4x8xbf16>
    %cst_48 = arith.constant dense<0.000000e+00> : vector<192x8xf32>
    %51 = tpu.matmul %42, %50, %cst_48 {dimension_numbers = #tpu.dot_dimension_numbers<[1], [0], [0], [1], [0, 0, 1, 1], [], []>} : vector<192x4xbf16>, vector<4x8xbf16>, vector<192x8xf32> -> vector<192x8xf32>
    %52 = vector.shape_cast %51 : vector<192x8xf32> to vector<8x24x8xf32>
    %53 = vector.extract_strided_slice %52 {offsets = [0, 1, 0], sizes = [8, 16, 8], strides = [1, 1, 1]} : vector<8x24x8xf32> to vector<8x16x8xf32>
    %54 = arith.addf %48, %53 : vector<8x16x8xf32>
    %c2_49 = arith.constant 2 : index
    %c2_50 = arith.constant 2 : index
    %c0_51 = arith.constant 0 : index
    %c0_52 = arith.constant 0 : index
    %55 = vector.load %arg3[%c2_49, %c2_50, %c0_51, %c0_52] : memref<3x3x4x8xbf16, #tpu.memory_space<vmem>>, vector<1x1x4x8xbf16>
    %56 = vector.shape_cast %55 : vector<1x1x4x8xbf16> to vector<4x8xbf16>
    %cst_53 = arith.constant dense<0.000000e+00> : vector<192x8xf32>
    %57 = tpu.matmul %42, %56, %cst_53 {dimension_numbers = #tpu.dot_dimension_numbers<[1], [0], [0], [1], [0, 0, 1, 1], [], []>} : vector<192x4xbf16>, vector<4x8xbf16>, vector<192x8xf32> -> vector<192x8xf32>
    %58 = vector.shape_cast %57 : vector<192x8xf32> to vector<8x24x8xf32>
    %59 = vector.extract_strided_slice %58 {offsets = [0, 2, 0], sizes = [8, 16, 8], strides = [1, 1, 1]} : vector<8x24x8xf32> to vector<8x16x8xf32>
    %60 = arith.addf %54, %59 : vector<8x16x8xf32>
    %c0_54 = arith.constant 0 : index
    %c0_55 = arith.constant 0 : index
    %c0_56 = arith.constant 0 : index
    %c0_57 = arith.constant 0 : index
    %61 = vector.load %arg4[%c0_54, %c0_55, %c0_56, %c0_57] : memref<1x8x16x8xf32, #tpu.memory_space<vmem>>, vector<1x8x16x8xf32>
    %62 = vector.shape_cast %61 : vector<1x8x16x8xf32> to vector<8x16x8xf32>
    %63 = vector.shape_cast %60 : vector<8x16x8xf32> to vector<1x8x16x8xf32>
    tpu.vector_store %arg4[%c0_54, %c0_55, %c0_56, %c0_57], %63 {strides = array<i32>} : memref<1x8x16x8xf32, #tpu.memory_space<vmem>>, vector<1x8x16x8xf32>,
    %cst_58 = arith.constant dense<0.000000e+00> : vector<8xf32>
    %64 = vector.multi_reduction <add>, %60, %cst_58 [0, 1] : vector<8x16x8xf32> to vector<8xf32>
    %65 = vector.shape_cast %64 : vector<8xf32> to vector<1x1x8xf32>
    %66 = vector.shape_cast %65 : vector<1x1x8xf32> to vector<1x8xf32>
    %67 = arith.mulf %60, %60 : vector<8x16x8xf32>
    %cst_59 = arith.constant dense<0.000000e+00> : vector<8xf32>
    %68 = vector.multi_reduction <add>, %67, %cst_59 [0, 1] : vector<8x16x8xf32> to vector<8xf32>
    %69 = vector.shape_cast %68 : vector<8xf32> to vector<1x1x8xf32>
    %70 = vector.shape_cast %69 : vector<1x1x8xf32> to vector<1x8xf32>
    %c0_60 = arith.constant 0 : index
    %c0_61 = arith.constant 0 : index
    %c0_62 = arith.constant 0 : index
    %c0_63 = arith.constant 0 : index
    %71 = vector.load %arg5[%c0_60, %c0_61, %c0_62, %c0_63] : memref<1x1x2x8xf32, #tpu.memory_space<vmem>>, vector<1x1x1x8xf32>
    %72 = vector.shape_cast %71 : vector<1x1x1x8xf32> to vector<1x8xf32>
    %73 = vector.shape_cast %66 : vector<1x8xf32> to vector<1x1x1x8xf32>
    tpu.vector_store %arg5[%c0_60, %c0_61, %c0_62, %c0_63], %73 {strides = array<i32>} : memref<1x1x2x8xf32, #tpu.memory_space<vmem>>, vector<1x1x1x8xf32>,
    %c0_64 = arith.constant 0 : index
    %c0_65 = arith.constant 0 : index
    %c1_66 = arith.constant 1 : index
    %c0_67 = arith.constant 0 : index
    %74 = vector.load %arg5[%c0_64, %c0_65, %c1_66, %c0_67] : memref<1x1x2x8xf32, #tpu.memory_space<vmem>>, vector<1x1x1x8xf32>
    %75 = vector.shape_cast %74 : vector<1x1x1x8xf32> to vector<1x8xf32>
    %76 = vector.shape_cast %70 : vector<1x8xf32> to vector<1x1x1x8xf32>
    tpu.vector_store %arg5[%c0_64, %c0_65, %c1_66, %c0_67], %76 {strides = array<i32>} : memref<1x1x2x8xf32, #tpu.memory_space<vmem>>, vector<1x1x1x8xf32>,
    return
  }
  func.func @transform_0(%arg0: i32, %arg1: i32) -> (i32, i32, i32, i32) {
    %c0_i32 = arith.constant 0 : i32
    %c0_i32_0 = arith.constant 0 : i32
    %c0_i32_1 = arith.constant 0 : i32
    return %arg0, %c0_i32, %arg1, %c0_i32_0 : i32, i32, i32, i32
  }
  func.func @transform_1(%arg0: i32, %arg1: i32) -> (i32, i32, i32, i32) {
    %c0_i32 = arith.constant 0 : i32
    %c0_i32_0 = arith.constant 0 : i32
    %c0_i32_1 = arith.constant 0 : i32
    %c0_i32_2 = arith.constant 0 : i32
    %c0_i32_3 = arith.constant 0 : i32
    return %c0_i32, %c0_i32_0, %c0_i32_1, %c0_i32_2 : i32, i32, i32, i32
  }
  func.func @transform_2(%arg0: i32, %arg1: i32) -> (i32, i32, i32, i32) {
    %c0_i32 = arith.constant 0 : i32
    %c0_i32_0 = arith.constant 0 : i32
    %c0_i32_1 = arith.constant 0 : i32
    return %arg0, %arg1, %c0_i32, %c0_i32_0 : i32, i32, i32, i32
  }
  func.func @transform_3(%arg0: i32, %arg1: i32) -> (i32, i32, i32, i32) {
    %c0_i32 = arith.constant 0 : i32
    %c0_i32_0 = arith.constant 0 : i32
    %c0_i32_1 = arith.constant 0 : i32
    return %arg0, %arg1, %c0_i32, %c0_i32_0 : i32, i32, i32, i32
  }
}

module attributes {stable_mosaic.version = 11 : i64} {
  func.func @_scale_shift_kernel(%arg0: i32, %arg1: i32, %arg2: memref<1x8x16x8xf32, #tpu.memory_space<vmem>>, %arg3: memref<1x1x8xf32, #tpu.memory_space<vmem>>, %arg4: memref<1x1x8xf32, #tpu.memory_space<vmem>>, %arg5: memref<1x8x128xf32, #tpu.memory_space<vmem>>) attributes {dimension_semantics = [#tpu.dimension_semantics<parallel>, #tpu.dimension_semantics<parallel>], iteration_bounds = array<i64: 2, 2>, scalar_prefetch = 0 : i64, scratch_operands = 0 : i64, tpu.core_type = #tpu.core_type<tc>, window_params = [{transform_indices = @transform_0, window_bounds = array<i64: 1, 8, 16, 8>}, {transform_indices = @transform_1, window_bounds = array<i64: 1, 1, 8>}, {transform_indices = @transform_2, window_bounds = array<i64: 1, 1, 8>}, {transform_indices = @transform_3, window_bounds = array<i64: 1, 8, 128>}]} {
    %c0 = arith.constant 0 : index
    %c0_0 = arith.constant 0 : index
    %c0_1 = arith.constant 0 : index
    %c0_2 = arith.constant 0 : index
    %0 = vector.load %arg2[%c0, %c0_0, %c0_1, %c0_2] : memref<1x8x16x8xf32, #tpu.memory_space<vmem>>, vector<1x8x16x8xf32>
    %1 = vector.shape_cast %0 : vector<1x8x16x8xf32> to vector<8x16x8xf32>
    %c0_3 = arith.constant 0 : index
    %c0_4 = arith.constant 0 : index
    %c0_5 = arith.constant 0 : index
    %2 = vector.load %arg3[%c0_3, %c0_4, %c0_5] : memref<1x1x8xf32, #tpu.memory_space<vmem>>, vector<1x1x8xf32>
    %3 = vector.shape_cast %2 : vector<1x1x8xf32> to vector<1x8xf32>
    %4 = vector.shape_cast %3 : vector<1x8xf32> to vector<1x1x8xf32>
    %5 = vector.broadcast %4 : vector<1x1x8xf32> to vector<8x16x8xf32>
    %6 = arith.mulf %1, %5 : vector<8x16x8xf32>
    %c0_6 = arith.constant 0 : index
    %c0_7 = arith.constant 0 : index
    %c0_8 = arith.constant 0 : index
    %7 = vector.load %arg4[%c0_6, %c0_7, %c0_8] : memref<1x1x8xf32, #tpu.memory_space<vmem>>, vector<1x1x8xf32>
    %8 = vector.shape_cast %7 : vector<1x1x8xf32> to vector<1x8xf32>
    %9 = vector.shape_cast %8 : vector<1x8xf32> to vector<1x1x8xf32>
    %10 = vector.broadcast %9 : vector<1x1x8xf32> to vector<8x16x8xf32>
    %11 = arith.addf %6, %10 : vector<8x16x8xf32>
    %cst = arith.constant 0.000000e+00 : f32
    %12 = vector.broadcast %cst : f32 to vector<8x16x8xf32>
    %13 = arith.maximumf %11, %12 : vector<8x16x8xf32>
    %14 = vector.shape_cast %13 : vector<8x16x8xf32> to vector<128x8xf32>
    %15 = tpu.transpose %14, [1, 0] : vector<128x8xf32> -> vector<8x128xf32>
    %c0_9 = arith.constant 0 : index
    %c0_10 = arith.constant 0 : index
    %c0_11 = arith.constant 0 : index
    %16 = vector.load %arg5[%c0_9, %c0_10, %c0_11] : memref<1x8x128xf32, #tpu.memory_space<vmem>>, vector<1x8x128xf32>
    %17 = vector.shape_cast %16 : vector<1x8x128xf32> to vector<8x128xf32>
    %18 = vector.shape_cast %15 : vector<8x128xf32> to vector<1x8x128xf32>
    tpu.vector_store %arg5[%c0_9, %c0_10, %c0_11], %18 {strides = array<i32>} : memref<1x8x128xf32, #tpu.memory_space<vmem>>, vector<1x8x128xf32>,
    return
  }
  func.func @transform_0(%arg0: i32, %arg1: i32) -> (i32, i32, i32, i32) {
    %c0_i32 = arith.constant 0 : i32
    %c0_i32_0 = arith.constant 0 : i32
    %c0_i32_1 = arith.constant 0 : i32
    return %arg0, %arg1, %c0_i32, %c0_i32_0 : i32, i32, i32, i32
  }
  func.func @transform_1(%arg0: i32, %arg1: i32) -> (i32, i32, i32) {
    %c0_i32 = arith.constant 0 : i32
    %c0_i32_0 = arith.constant 0 : i32
    %c0_i32_1 = arith.constant 0 : i32
    return %arg0, %c0_i32, %c0_i32_0 : i32, i32, i32
  }
  func.func @transform_2(%arg0: i32, %arg1: i32) -> (i32, i32, i32) {
    %c0_i32 = arith.constant 0 : i32
    %c0_i32_0 = arith.constant 0 : i32
    %c0_i32_1 = arith.constant 0 : i32
    return %arg0, %c0_i32, %c0_i32_0 : i32, i32, i32
  }
  func.func @transform_3(%arg0: i32, %arg1: i32) -> (i32, i32, i32) {
    %c0_i32 = arith.constant 0 : i32
    %c0_i32_0 = arith.constant 0 : i32
    return %arg0, %c0_i32, %arg1 : i32, i32, i32
  }
}

</mosaic_0001>

<llo_original>
// kernel: conv_block_forward.3
$region0: #{conv_block_forward.3}
  #allocation0 [shape = 'u32[]', space=smem, size = 0x4, offset = 0x4, fixed_abs, tag = 'smem constant byte address 0x4 - core index']
  #allocation1 [shape = 'u32[72,128]{1,0:T(1,128)}', space=vmem, size = 0x9000, scoped, tag = 'internal scratch']
  %s0 = inlined_call_operand.vmem [shape: f32[2,16,16,8], index: 0, kind: input, shape index: {}]
  %s1 = inlined_call_operand.vmem [shape: f32[2,1,8], index: 1, kind: input, shape index: {}]
  %s2 = inlined_call_operand.vmem [shape: f32[2,1,8], index: 2, kind: input, shape index: {}]
  %s3 = inlined_call_operand.vmem [shape: f32[2,8,256], index: 3, kind: output, shape index: {}]
  %s4 = sld [smem:[#allocation0]]
  $region45: #{conv_block_forward.3} parent=0
    _
  %s6 = ssub.s32 1, %s4
  %s7 = scalar_select 0, %s6, %s4
  loop: start=0, step=1, limit=6
  $region2: #{conv_block_forward.3} parent=0 // loop_pre_header
    _
  $region3: #{conv_block_forward.3} parent=0 // loop_header
    %s9 = sphi 0, %s13
    %p10 = scmp.ge.s32.totalorder %s9, 6
    %s16 = sphi 0, %s28
    %s17 = sphi 0, %s24
    %s18 = sphi 0, %s16
    %s19 = sphi 0, %s17
    %s20 = sphi 0, %s18
    %s21 = sphi 0, %s19
    %s33 = sphi 0, %s35
    %s36 = sphi 0, %s33
    %s37 = sphi 0, %s36
    %s53 = sphi 0, %s37
    %s59 = sphi 0, %s61
    %s62 = sphi 0, %s59
    %s63 = sphi 0, %s62
    %s79 = sphi 0, %s63
    %s85 = sphi 0, %s87
    %s88 = sphi 0, %s85
    %s89 = sphi 0, %s88
    %s105 = sphi 0, %s89
    %s113 = sphi 0, %s115
    %s116 = sphi 0, %s113
    %s117 = sphi 0, %s116
    %s133 = sphi 0, %s117
  $region4: #{conv_block_forward.3} parent=0 // loop_header_branch
    %12 = sbr.rel (%p10) target = $region8
  $region5: #{conv_block_forward.3} parent=0 // loop_body
    %s14 = ssub.s32 %s9, 1
    %s15 = ssub.s32 %s9, 2
    %s22 = sadd.s32 1, %s17
    %p23 = scmp.ge.s32.totalorder %s22, 2
    %s24 = scalar_select %p23, 0, %s22
    %s25 = sadd.s32 1, %s16
    %s26 = scalar_select %p23, %s25, %s16
    %p27 = scmp.ge.s32.totalorder %s26, 2
    %s28 = scalar_select %p27, 0, %s26
    %s29 = ssub.s32 %s16, %s28
    %s30 = ssub.s32 %s17, %s24
    %s31 = sor.u32 %s29, %s30
    %p32 = scmp.eq.s32.totalorder %s31, 0
    %s34 = sadd.s32 %s33, 1
    %s35 = scalar_select %p32, %s33, %s34
    %p38 = pneg %p32
    %p39 = scmp.eq.s32.totalorder %s9, 3
    %p40 = por %p38, %p39
    %p41 = scmp.ne.s32.totalorder %s33, %s36
    %p42 = scmp.eq.s32.totalorder %s9, 0
    %p43 = por %p41, %p42
    %p44 = scmp.ne.s32.totalorder %s33, %s36
    %p45 = scmp.eq.s32.totalorder %s14, 3
    %p46 = por %p44, %p45
    %p47 = scmp.ne.s32.totalorder %s36, %s37
    %p48 = scmp.eq.s32.totalorder %s14, 0
    %p49 = por %p47, %p48
    %p50 = scmp.ne.s32.totalorder %s36, %s37
    %p51 = scmp.eq.s32.totalorder %s15, 3
    %p52 = por %p50, %p51
    %p54 = scmp.ne.s32.totalorder %s37, %s53
    %p55 = scmp.eq.s32.totalorder %s15, 0
    %p56 = por %p54, %p55
    %s57 = ssub.s32 %s16, %s28
    %p58 = scmp.eq.s32.totalorder %s57, 0
    %s60 = sadd.s32 %s59, 1
    %s61 = scalar_select %p58, %s59, %s60
    %p64 = pneg %p58
    %p65 = scmp.eq.s32.totalorder %s9, 3
    %p66 = por %p64, %p65
    %p67 = scmp.ne.s32.totalorder %s59, %s62
    %p68 = scmp.eq.s32.totalorder %s9, 0
    %p69 = por %p67, %p68
    %p70 = scmp.ne.s32.totalorder %s59, %s62
    %p71 = scmp.eq.s32.totalorder %s14, 3
    %p72 = por %p70, %p71
    %p73 = scmp.ne.s32.totalorder %s62, %s63
    %p74 = scmp.eq.s32.totalorder %s14, 0
    %p75 = por %p73, %p74
    %p76 = scmp.ne.s32.totalorder %s62, %s63
    %p77 = scmp.eq.s32.totalorder %s15, 3
    %p78 = por %p76, %p77
    %p80 = scmp.ne.s32.totalorder %s63, %s79
    %p81 = scmp.eq.s32.totalorder %s15, 0
    %p82 = por %p80, %p81
    %s83 = ssub.s32 %s16, %s28
    %p84 = scmp.eq.s32.totalorder %s83, 0
    %s86 = sadd.s32 %s85, 1
    %s87 = scalar_select %p84, %s85, %s86
    %p90 = pneg %p84
    %p91 = scmp.eq.s32.totalorder %s9, 3
    %p92 = por %p90, %p91
    %p93 = scmp.ne.s32.totalorder %s85, %s88
    %p94 = scmp.eq.s32.totalorder %s9, 0
    %p95 = por %p93, %p94
    %p96 = scmp.ne.s32.totalorder %s85, %s88
    %p97 = scmp.eq.s32.totalorder %s14, 3
    %p98 = por %p96, %p97
    %p99 = scmp.ne.s32.totalorder %s88, %s89
    %p100 = scmp.eq.s32.totalorder %s14, 0
    %p101 = por %p99, %p100
    %p102 = scmp.ne.s32.totalorder %s88, %s89
    %p103 = scmp.eq.s32.totalorder %s15, 3
    %p104 = por %p102, %p103
    %p106 = scmp.ne.s32.totalorder %s89, %s105
    %p107 = scmp.eq.s32.totalorder %s15, 0
    %p108 = por %p106, %p107
    %s109 = ssub.s32 %s16, %s28
    %s110 = ssub.s32 %s17, %s24
    %s111 = sor.u32 %s109, %s110
    %p112 = scmp.eq.s32.totalorder %s111, 0
    %s114 = sadd.s32 %s113, 1
    %s115 = scalar_select %p112, %s113, %s114
    %p118 = pneg %p112
    %p119 = scmp.eq.s32.totalorder %s9, 3
    %p120 = por %p118, %p119
    %p121 = scmp.ne.s32.totalorder %s113, %s116
    %p122 = scmp.eq.s32.totalorder %s9, 0
    %p123 = por %p121, %p122
    %p124 = scmp.ne.s32.totalorder %s113, %s116
    %p125 = scmp.eq.s32.totalorder %s14, 3
    %p126 = por %p124, %p125
    %p127 = scmp.ne.s32.totalorder %s116, %s117
    %p128 = scmp.eq.s32.totalorder %s14, 0
    %p129 = por %p127, %p128
    %p130 = scmp.ne.s32.totalorder %s116, %s117
    %p131 = scmp.eq.s32.totalorder %s15, 3
    %p132 = por %p130, %p131
    %p134 = scmp.ne.s32.totalorder %s117, %s133
    %p135 = scmp.eq.s32.totalorder %s15, 0
    %p136 = por %p134, %p135
    %p137 = scmp.le.s32.totalorder 1, %s9
    %p138 = scmp.lt.s32.totalorder %s9, 5
    %p139 = pnand %p137, %p138
    %p140 = pneg %p139
    // Predicated region
    $region9: #{conv_block_forward.3} parent=5 // pred_check
      _
    $region10: #{conv_block_forward.3} parent=5 // pred_check_branch
      %142 = sbr.rel (%p139) target = $region12
    $region11: #{conv_block_forward.3} parent=5 // pred_region
      %s143 = ssub.s32 %s9, 1
    $region12: #{conv_block_forward.3} parent=5 // pred_fallthru
      _
    %p144 = scmp.lt.s32.totalorder %s9, 4
    // Predicated region
    $region13: #{conv_block_forward.3} parent=5 // pred_check
      %p145 = pneg %p144
    $region14: #{conv_block_forward.3} parent=5 // pred_check_branch
      %147 = sbr.rel (%p145) target = $region16
    $region15: #{conv_block_forward.3} parent=5 // pred_region
      // Predicated region
      $region17: #{conv_block_forward.3} parent=15 // pred_check
        %p148 = pneg %p43
      $region18: #{conv_block_forward.3} parent=15 // pred_check_branch
        %150 = sbr.rel (%p148) target = $region20
      $region19: #{conv_block_forward.3} parent=15 // pred_region
        %s151 = smul.u32 8, %s17
        %p152 = scmp.lt.s32.totalorder %s16, 1
        %s153 = scalar_select %p152, %s16, 1
        %p154 = scmp.lt.s32.totalorder %s151, 15
        %s155 = scalar_select %p154, %s151, 15
        %s156 = smul.addr %s155, 2
        %s157 = smul.addr %s153, 32
        %s158 = sadd.s32 %s156, %s157
        %s159 = smul.addr %s158, 8
        %s160 = scalar_lea.vmem %s0, %s159
        %s161 = smul.u32 8, %s17
      $region20: #{conv_block_forward.3} parent=15 // pred_fallthru
        _
      // Predicated region
      $region21: #{conv_block_forward.3} parent=15 // pred_check
        %p162 = pneg %p69
      $region22: #{conv_block_forward.3} parent=15 // pred_check_branch
        %164 = sbr.rel (%p162) target = $region24
      $region23: #{conv_block_forward.3} parent=15 // pred_region
        %p165 = scmp.lt.s32.totalorder %s16, 1
        %s166 = scalar_select %p165, %s16, 1
        %s167 = scalar_lea.vmem %s1, %s166
      $region24: #{conv_block_forward.3} parent=15 // pred_fallthru
        _
      // Predicated region
      $region25: #{conv_block_forward.3} parent=15 // pred_check
        %p168 = pneg %p95
      $region26: #{conv_block_forward.3} parent=15 // pred_check_branch
        %170 = sbr.rel (%p168) target = $region28
      $region27: #{conv_block_forward.3} parent=15 // pred_region
        %p171 = scmp.lt.s32.totalorder %s16, 1
        %s172 = scalar_select %p171, %s16, 1
        %s173 = scalar_lea.vmem %s2, %s172
      $region28: #{conv_block_forward.3} parent=15 // pred_fallthru
        _
    $region16: #{conv_block_forward.3} parent=5 // pred_fallthru
      _
    %p174 = scmp.le.s32.totalorder 1, %s9
    %p175 = scmp.lt.s32.totalorder %s9, 5
    %p176 = pnand %p174, %p175
    %p177 = pneg %p176
    // Predicated region
    $region29: #{conv_block_forward.3} parent=5 // pred_check
      _
    $region30: #{conv_block_forward.3} parent=5 // pred_check_branch
      %179 = sbr.rel (%p176) target = $region32
    $region31: #{conv_block_forward.3} parent=5 // pred_region
      %s180 = ssub.s32 %s9, 1
      %s181 = smul.u32 8, %s19
      %p182 = scmp.lt.s32.totalorder %s18, 1
      %s183 = scalar_select %p182, %s18, 1
      %p184 = scmp.lt.s32.totalorder %s181, 15
      %s185 = scalar_select %p184, %s181, 15
      %s186 = smul.addr %s185, 2
      %s187 = smul.addr %s183, 32
      %s188 = sadd.s32 %s186, %s187
      %s189 = smul.addr %s188, 8
      %s190 = scalar_lea.vmem %s0, %s189
      %p191 = pneg %p49
      %p192 = pneg %p46
      %p193 = scmp.lt.s32.totalorder %s18, 1
      %s194 = scalar_select %p193, %s18, 1
      %s195 = scalar_lea.vmem %s1, %s194
      %p196 = pneg %p75
      %p197 = pneg %p72
      %p198 = scmp.lt.s32.totalorder %s18, 1
      %s199 = scalar_select %p198, %s18, 1
      %s200 = scalar_lea.vmem %s2, %s199
      %p201 = pneg %p101
      %p202 = pneg %p98
      %p203 = pneg %p129
      %p204 = pneg %p126
      %p205 = scmp.lt.s32.totalorder %s18, 1
      %s206 = scalar_select %p205, %s18, 1
      %p207 = scmp.lt.s32.totalorder %s19, 1
      %s208 = scalar_select %p207, %s19, 1
      %s209 = smul.addr %s206, 2
      %s210 = sadd.s32 %s208, %s209
      %s211 = smul.addr %s210, 8
      %s212 = scalar_lea.vmem %s3, %s211
      %s213 = smul.u32 8, %s19
      %p214 = scmp.lt.s32.totalorder %s18, 1
      %s215 = scalar_select %p214, %s18, 1
      %p216 = scmp.lt.s32.totalorder %s213, 15
      %s217 = scalar_select %p216, %s213, 15
      %s218 = smul.addr %s217, 2
      %s219 = smul.addr %s215, 32
      %s220 = sadd.s32 %s218, %s219
      %s221 = smul.addr %s220, 8
      %s222 = scalar_lea.vmem %s0, %s221
      %s223 = smul.u32 8, %s19
      %p224 = scmp.lt.s32.totalorder %s18, 1
      %s225 = scalar_select %p224, %s18, 1
      %s226 = scalar_lea.vmem %s1, %s225
      %p227 = scmp.lt.s32.totalorder %s18, 1
      %s228 = scalar_select %p227, %s18, 1
      %s229 = scalar_lea.vmem %s2, %s228
      %p230 = scmp.lt.s32.totalorder %s18, 1
      %s231 = scalar_select %p230, %s18, 1
      %p232 = scmp.lt.s32.totalorder %s19, 1
      %s233 = scalar_select %p232, %s19, 1
      %s234 = smul.addr %s231, 2
      %s235 = sadd.s32 %s233, %s234
      %s236 = smul.addr %s235, 8
      %s237 = scalar_lea.vmem %s3, %s236
      %v238 = vld [vmem:[%s222] sm:$0xff]
      %v239 = vld [vmem:[%s222 + $0x8] sm:$0xff]
      %v240 = vld [vmem:[%s222 + $0x10] sm:$0xff]
      %v241 = vld [vmem:[%s222 + $0x18] sm:$0xff]
      %v242 = vld [vmem:[%s222 + $0x20] sm:$0xff]
      %v243 = vld [vmem:[%s222 + $0x28] sm:$0xff]
      %v244 = vld [vmem:[%s222 + $0x30] sm:$0xff]
      %v245 = vld [vmem:[%s222 + $0x38] sm:$0xff]
      %v246 = vld [vmem:[%s222 + $0x40] sm:$0xff]
      %v247 = vld [vmem:[%s222 + $0x48] sm:$0xff]
      %v248 = vld [vmem:[%s222 + $0x50] sm:$0xff]
      %v249 = vld [vmem:[%s222 + $0x58] sm:$0xff]
      %v250 = vld [vmem:[%s222 + $0x60] sm:$0xff]
      %v251 = vld [vmem:[%s222 + $0x68] sm:$0xff]
      %v252 = vld [vmem:[%s222 + $0x70] sm:$0xff]
      %v253 = vld [vmem:[%s222 + $0x78] sm:$0xff]
      %v254 = vld [vmem:[%s226] sm:$0x1]
      %v256 = vperm.slane %v254, 0
      %v258 = vmul.f32 %v238, %v256
      %v259 = vmul.f32 %v239, %v256
      %v260 = vmul.f32 %v240, %v256
      %v261 = vmul.f32 %v241, %v256
      %v262 = vmul.f32 %v242, %v256
      %v263 = vmul.f32 %v243, %v256
      %v264 = vmul.f32 %v244, %v256
      %v265 = vmul.f32 %v245, %v256
      %v266 = vmul.f32 %v246, %v256
      %v267 = vmul.f32 %v247, %v256
      %v268 = vmul.f32 %v248, %v256
      %v269 = vmul.f32 %v249, %v256
      %v270 = vmul.f32 %v250, %v256
      %v271 = vmul.f32 %v251, %v256
      %v272 = vmul.f32 %v252, %v256
      %v273 = vmul.f32 %v253, %v256
      %v274 = vld [vmem:[%s229] sm:$0x1]
      %v276 = vperm.slane %v274, 0
      %v278 = vadd.f32 %v258, %v276
      %v279 = vadd.f32 %v259, %v276
      %v280 = vadd.f32 %v260, %v276
      %v281 = vadd.f32 %v261, %v276
      %v282 = vadd.f32 %v262, %v276
      %v283 = vadd.f32 %v263, %v276
      %v284 = vadd.f32 %v264, %v276
      %v285 = vadd.f32 %v265, %v276
      %v286 = vadd.f32 %v266, %v276
      %v287 = vadd.f32 %v267, %v276
      %v288 = vadd.f32 %v268, %v276
      %v289 = vadd.f32 %v269, %v276
      %v290 = vadd.f32 %v270, %v276
      %v291 = vadd.f32 %v271, %v276
      %v292 = vadd.f32 %v272, %v276
      %v293 = vadd.f32 %v273, %v276
      %v294 = vmax.f32 %v278, 0.0
      %v295 = vmax.f32 %v279, 0.0
      %v296 = vmax.f32 %v280, 0.0
      %v297 = vmax.f32 %v281, 0.0
      %v298 = vmax.f32 %v282, 0.0
      %v299 = vmax.f32 %v283, 0.0
      %v300 = vmax.f32 %v284, 0.0
      %v301 = vmax.f32 %v285, 0.0
      %v302 = vmax.f32 %v286, 0.0
      %v303 = vmax.f32 %v287, 0.0
      %v304 = vmax.f32 %v288, 0.0
      %v305 = vmax.f32 %v289, 0.0
      %v306 = vmax.f32 %v290, 0.0
      %v307 = vmax.f32 %v291, 0.0
      %v308 = vmax.f32 %v292, 0.0
      %v309 = vmax.f32 %v293, 0.0
      %310 = vxpose.xlu0.b32.start [1/16] %v294, 128
      %311 = vxpose.xlu0.b32.cont [2/16] %v295, 128
      %312 = vxpose.xlu0.b32.cont [3/16] %v296, 128
      %313 = vxpose.xlu0.b32.cont [4/16] %v297, 128
      %314 = vxpose.xlu0.b32.cont [5/16] %v298, 128
      %315 = vxpose.xlu0.b32.cont [6/16] %v299, 128
      %316 = vxpose.xlu0.b32.cont [7/16] %v300, 128
      %317 = vxpose.xlu0.b32.cont [8/16] %v301, 128
      %318 = vxpose.xlu0.b32.cont [9/16] %v302, 128
      %319 = vxpose.xlu0.b32.cont [10/16] %v303, 128
      %320 = vxpose.xlu0.b32.cont [11/16] %v304, 128
      %321 = vxpose.xlu0.b32.cont [12/16] %v305, 128
      %322 = vxpose.xlu0.b32.cont [13/16] %v306, 128
      %323 = vxpose.xlu0.b32.cont [14/16] %v307, 128
      %324 = vxpose.xlu0.b32.cont [15/16] %v308, 128
      %325 = vxpose.xlu0.b32.end [16/16] %v309, 128
      %v326 = vpop.trf.xlu0
      %v327 = vpop.trf.xlu0
      %v328 = vpop.trf.xlu0
      %v329 = vpop.trf.xlu0
      %v330 = vpop.trf.xlu0
      %v331 = vpop.trf.xlu0
      %v332 = vpop.trf.xlu0
      %v333 = vpop.trf.xlu0
      %v334 = vpop.trf.xlu0
      %v335 = vpop.trf.xlu0
      %v336 = vpop.trf.xlu0
      %v337 = vpop.trf.xlu0
      %v338 = vpop.trf.xlu0
      %v339 = vpop.trf.xlu0
      %v340 = vpop.trf.xlu0
      %v341 = vpop.trf.xlu0
      %342 = vst [vmem:[%s237] sm:$0xff] %v326
      %p343 = scmp.lt.s32.totalorder %s18, 1
      %s344 = scalar_select %p343, %s18, 1
      %p345 = scmp.lt.s32.totalorder %s19, 1
      %s346 = scalar_select %p345, %s19, 1
      %s347 = smul.addr %s344, 2
      %s348 = sadd.s32 %s346, %s347
      %s349 = smul.addr %s348, 8
      %s350 = scalar_lea.vmem %s3, %s349
      // Predicated region
      $region33: #{conv_block_forward.3} parent=31 // pred_check
        %p351 = pneg %p126
      $region34: #{conv_block_forward.3} parent=31 // pred_check_branch
        %353 = sbr.rel (%p351) target = $region36
      $region35: #{conv_block_forward.3} parent=31 // pred_region
        _
      $region36: #{conv_block_forward.3} parent=31 // pred_fallthru
        _
    $region32: #{conv_block_forward.3} parent=5 // pred_fallthru
      _
    %p354 = scmp.le.s32.totalorder 2, %s9
    // Predicated region
    $region37: #{conv_block_forward.3} parent=5 // pred_check
      %p355 = pneg %p354
    $region38: #{conv_block_forward.3} parent=5 // pred_check_branch
      %357 = sbr.rel (%p355) target = $region40
    $region39: #{conv_block_forward.3} parent=5 // pred_region
      %s358 = ssub.s32 %s9, 2
      // Predicated region
      $region41: #{conv_block_forward.3} parent=39 // pred_check
        %p359 = pneg %p132
      $region42: #{conv_block_forward.3} parent=39 // pred_check_branch
        %361 = sbr.rel (%p359) target = $region44
      $region43: #{conv_block_forward.3} parent=39 // pred_region
        %p362 = scmp.lt.s32.totalorder %s20, 1
        %s363 = scalar_select %p362, %s20, 1
        %p364 = scmp.lt.s32.totalorder %s21, 1
        %s365 = scalar_select %p364, %s21, 1
        %s366 = smul.addr %s363, 2
        %s367 = sadd.s32 %s365, %s366
        %s368 = smul.addr %s367, 8
        %s369 = scalar_lea.vmem %s3, %s368
      $region44: #{conv_block_forward.3} parent=39 // pred_fallthru
        _
    $region40: #{conv_block_forward.3} parent=5 // pred_fallthru
      _
  $region6: #{conv_block_forward.3} parent=0 // loop_footer
    %s13 = sadd.s32 1, %s9
  $region7: #{conv_block_forward.3} parent=0 // loop_footer_branch
    %8 = sbr.rel target = $region3
  $region8: #{conv_block_forward.3} parent=0 // loop_exit
    _

// kernel: conv_block_forward.2
$region0: #{conv_block_forward.2}
  #allocation0 [shape = 'u32[]', space=smem, size = 0x4, offset = 0x4, fixed_abs, tag = 'smem constant byte address 0x4 - core index']
  #allocation1 [shape = 'u32[72,128]{1,0:T(1,128)}', space=vmem, size = 0x9000, scoped, tag = 'internal scratch']
  %s0 = inlined_call_operand.vmem [shape: bf16[2,3,384,4], index: 0, kind: input, shape index: {}]
  %s1 = inlined_call_operand.vmem [shape: bf16[3,3,4,8], index: 1, kind: input, shape index: {}]
  %s2 = inlined_call_operand.vmem [shape: f32[2,16,16,8], index: 2, kind: output, shape index: {0}]
  %s3 = inlined_call_operand.vmem [shape: f32[2,2,2,8], index: 3, kind: output, shape index: {1}]
  %4 = xla_tuple %s2, %s3
  %s5 = sld [smem:[#allocation0]]
  $region90: #{conv_block_forward.2} parent=0
    _
  %s7 = ssub.s32 1, %s5
  %s8 = scalar_select 0, %s7, %s5
  $region1: #{conv_block_forward.2} parent=0
    #allocation2 [shape = 'u8[294912]{0}', space=vmem, size = 0x48000, scoped, tag = 'input window, operand 0']
    loop: start=0, step=1, limit=6
    $region2: #{conv_block_forward.2} parent=1 // loop_pre_header
      _
    $region3: #{conv_block_forward.2} parent=1 // loop_header
      %s10 = sphi 0, %s14
      %p11 = scmp.ge.s32.totalorder %s10, 6
      %s17 = sphi 0, %s29
      %s18 = sphi 0, %s25
      %s19 = sphi 0, %s17
      %s20 = sphi 0, %s18
      %s21 = sphi 0, %s19
      %s22 = sphi 0, %s20
      %s34 = sphi 0, %s36
      %s37 = sphi 0, %s34
      %s38 = sphi 0, %s37
      %s54 = sphi 0, %s38
      %s58 = sphi 0, %s58
      %s60 = sphi 0, %s58
      %s61 = sphi 0, %s60
      %s75 = sphi 0, %s61
      %s83 = sphi 0, %s85
      %s86 = sphi 0, %s83
      %s87 = sphi 0, %s86
      %s103 = sphi 0, %s87
      %s111 = sphi 0, %s113
      %s114 = sphi 0, %s111
      %s115 = sphi 0, %s114
      %s131 = sphi 0, %s115
    $region4: #{conv_block_forward.2} parent=1 // loop_header_branch
      %13 = sbr.rel (%p11) target = $region8
    $region5: #{conv_block_forward.2} parent=1 // loop_body
      %s15 = ssub.s32 %s10, 1
      %s16 = ssub.s32 %s10, 2
      %s23 = sadd.s32 1, %s18
      %p24 = scmp.ge.s32.totalorder %s23, 2
      %s25 = scalar_select %p24, 0, %s23
      %s26 = sadd.s32 1, %s17
      %s27 = scalar_select %p24, %s26, %s17
      %p28 = scmp.ge.s32.totalorder %s27, 2
      %s29 = scalar_select %p28, 0, %s27
      %s30 = ssub.s32 %s17, %s29
      %s31 = ssub.s32 %s18, %s25
      %s32 = sor.u32 %s30, %s31
      %p33 = scmp.eq.s32.totalorder %s32, 0
      %s35 = sadd.s32 %s34, 1
      %s36 = scalar_select %p33, %s34, %s35
      %p39 = pneg %p33
      %p40 = scmp.eq.s32.totalorder %s10, 3
      %p41 = por %p39, %p40
      %p42 = scmp.ne.s32.totalorder %s34, %s37
      %p43 = scmp.eq.s32.totalorder %s10, 0
      %p44 = por %p42, %p43
      %p45 = scmp.ne.s32.totalorder %s34, %s37
      %p46 = scmp.eq.s32.totalorder %s15, 3
      %p47 = por %p45, %p46
      %p48 = scmp.ne.s32.totalorder %s37, %s38
      %p49 = scmp.eq.s32.totalorder %s15, 0
      %p50 = por %p48, %p49
      %p51 = scmp.ne.s32.totalorder %s37, %s38
      %p52 = scmp.eq.s32.totalorder %s16, 3
      %p53 = por %p51, %p52
      %p55 = scmp.ne.s32.totalorder %s38, %s54
      %p56 = scmp.eq.s32.totalorder %s16, 0
      %p57 = por %p55, %p56
      %s59 = sadd.s32 %s58, 1
      %p62 = scmp.eq.s32.totalorder %s10, 3
      %p63 = scmp.ne.s32.totalorder %s58, %s60
      %p64 = scmp.eq.s32.totalorder %s10, 0
      %p65 = por %p63, %p64
      %p66 = scmp.ne.s32.totalorder %s58, %s60
      %p67 = scmp.eq.s32.totalorder %s15, 3
      %p68 = por %p66, %p67
      %p69 = scmp.ne.s32.totalorder %s60, %s61
      %p70 = scmp.eq.s32.totalorder %s15, 0
      %p71 = por %p69, %p70
      %p72 = scmp.ne.s32.totalorder %s60, %s61
      %p73 = scmp.eq.s32.totalorder %s16, 3
      %p74 = por %p72, %p73
      %p76 = scmp.ne.s32.totalorder %s61, %s75
      %p77 = scmp.eq.s32.totalorder %s16, 0
      %p78 = por %p76, %p77
      %s79 = ssub.s32 %s17, %s29
      %s80 = ssub.s32 %s18, %s25
      %s81 = sor.u32 %s79, %s80
      %p82 = scmp.eq.s32.totalorder %s81, 0
      %s84 = sadd.s32 %s83, 1
      %s85 = scalar_select %p82, %s83, %s84
      %p88 = pneg %p82
      %p89 = scmp.eq.s32.totalorder %s10, 3
      %p90 = por %p88, %p89
      %p91 = scmp.ne.s32.totalorder %s83, %s86
      %p92 = scmp.eq.s32.totalorder %s10, 0
      %p93 = por %p91, %p92
      %p94 = scmp.ne.s32.totalorder %s83, %s86
      %p95 = scmp.eq.s32.totalorder %s15, 3
      %p96 = por %p94, %p95
      %p97 = scmp.ne.s32.totalorder %s86, %s87
      %p98 = scmp.eq.s32.totalorder %s15, 0
      %p99 = por %p97, %p98
      %p100 = scmp.ne.s32.totalorder %s86, %s87
      %p101 = scmp.eq.s32.totalorder %s16, 3
      %p102 = por %p100, %p101
      %p104 = scmp.ne.s32.totalorder %s87, %s103
      %p105 = scmp.eq.s32.totalorder %s16, 0
      %p106 = por %p104, %p105
      %s107 = ssub.s32 %s17, %s29
      %s108 = ssub.s32 %s18, %s25
      %s109 = sor.u32 %s107, %s108
      %p110 = scmp.eq.s32.totalorder %s109, 0
      %s112 = sadd.s32 %s111, 1
      %s113 = scalar_select %p110, %s111, %s112
      %p116 = pneg %p110
      %p117 = scmp.eq.s32.totalorder %s10, 3
      %p118 = por %p116, %p117
      %p119 = scmp.ne.s32.totalorder %s111, %s114
      %p120 = scmp.eq.s32.totalorder %s10, 0
      %p121 = por %p119, %p120
      %p122 = scmp.ne.s32.totalorder %s111, %s114
      %p123 = scmp.eq.s32.totalorder %s15, 3
      %p124 = por %p122, %p123
      %p125 = scmp.ne.s32.totalorder %s114, %s115
      %p126 = scmp.eq.s32.totalorder %s15, 0
      %p127 = por %p125, %p126
      %p128 = scmp.ne.s32.totalorder %s114, %s115
      %p129 = scmp.eq.s32.totalorder %s16, 3
      %p130 = por %p128, %p129
      %p132 = scmp.ne.s32.totalorder %s115, %s131
      %p133 = scmp.eq.s32.totalorder %s16, 0
      %p134 = por %p132, %p133
      %p135 = scmp.le.s32.totalorder 1, %s10
      %p136 = scmp.lt.s32.totalorder %s10, 5
      %p137 = pnand %p135, %p136
      %p138 = pneg %p137
      // Predicated region
      $region9: #{conv_block_forward.2} parent=5 // pred_check
        _
      $region10: #{conv_block_forward.2} parent=5 // pred_check_branch
        %140 = sbr.rel (%p137) target = $region12
      $region11: #{conv_block_forward.2} parent=5 // pred_region
        %s141 = ssub.s32 %s10, 1
        // Predicated region
        $region13: #{conv_block_forward.2} parent=11 // pred_check
          %p142 = pneg %p71
        $region14: #{conv_block_forward.2} parent=11 // pred_check_branch
          %144 = sbr.rel (%p142) target = $region16
        $region15: #{conv_block_forward.2} parent=11 // pred_region
          _
        $region16: #{conv_block_forward.2} parent=11 // pred_fallthru
          _
      $region12: #{conv_block_forward.2} parent=5 // pred_fallthru
        _
      %p145 = scmp.lt.s32.totalorder %s10, 4
      // Predicated region
      $region17: #{conv_block_forward.2} parent=5 // pred_check
        %p146 = pneg %p145
      $region18: #{conv_block_forward.2} parent=5 // pred_check_branch
        %148 = sbr.rel (%p146) target = $region20
      $region19: #{conv_block_forward.2} parent=5 // pred_region
        // Predicated region
        $region21: #{conv_block_forward.2} parent=19 // pred_check
          %p149 = pneg %p44
        $region22: #{conv_block_forward.2} parent=19 // pred_check_branch
          %151 = sbr.rel (%p149) target = $region24
        $region23: #{conv_block_forward.2} parent=19 // pred_region
          %s152 = sand.u32 %s34, 1
          %s153 = sand.u32 %s34, 1
          %s154 = smul.addr %s153, 288
          %s155 = scalar_lea.vmem [#allocation2], %s154
          %s156 = smul.u32 24, %s18
          %s157 = smul.addr %s17, 144
          %s158 = sadd.s32 %s156, %s157
          %s159 = smul.addr %s158, 4
          %s160 = scalar_lea.vmem %s0, %s159
          // Predicated region
          $region25: #{conv_block_forward.2} parent=23 // pred_check
            _
          $region26: #{conv_block_forward.2} parent=23 // pred_check_branch
            %162 = sbr.rel (0) target = $region28
          $region27: #{conv_block_forward.2} parent=23 // pred_region
            // Predicated region
            $region29: #{conv_block_forward.2} parent=27 // pred_check
              _
            $region30: #{conv_block_forward.2} parent=27 // pred_check_branch
              %164 = sbr.rel target = $region32
            $region31: #{conv_block_forward.2} parent=27 // pred_region
              // Predicated region
              $region44: #{conv_block_forward.2} parent=31 // pred_check
                _
              $region45: #{conv_block_forward.2} parent=31 // pred_check_branch
                %322 = sbr.rel (0) target = $region47
              $region46: #{conv_block_forward.2} parent=31 // pred_region
                loop: start=0, step=1, limit=1
                $region48: #{conv_block_forward.2} parent=46 // loop_pre_header
                  _
                $region49: #{conv_block_forward.2} parent=46 // loop_header
                  %s324 = sphi 0, %s328
                  %p325 = scmp.ge.s32.totalorder %s324, 1
                  %s329 = sphi %s160, %s160
                  %s330 = sphi %s155, %s155
                $region50: #{conv_block_forward.2} parent=46 // loop_header_branch
                  %327 = sbr.rel (%p325) target = $region54
                $region51: #{conv_block_forward.2} parent=46 // loop_body
                  _
                $region52: #{conv_block_forward.2} parent=46 // loop_footer
                  %s328 = sadd.s32 1, %s324
                $region53: #{conv_block_forward.2} parent=46 // loop_footer_branch
                  %323 = sbr.rel target = $region49
                $region54: #{conv_block_forward.2} parent=46 // loop_exit
                  _
                %s332 = ssub.s32 16, 1
                loop: start=0, step=1, limit=1
                $region55: #{conv_block_forward.2} parent=46 // loop_pre_header
                  _
                $region56: #{conv_block_forward.2} parent=46 // loop_header
                  %s334 = sphi 0, %s338
                  %p335 = scmp.ge.s32.totalorder %s334, 1
                  %s339 = sphi %s160, %s160
                  %s340 = sphi %s155, %s155
                $region57: #{conv_block_forward.2} parent=46 // loop_header_branch
                  %337 = sbr.rel (%p335) target = $region61
                $region58: #{conv_block_forward.2} parent=46 // loop_body
                  %v341 = vld [vmem:[%s339] sm:%s332]
                  %342 = vst [vmem:[%s340] sm:%s332] %v341
                  %v343 = vld [vmem:[%s339 + $0x4] sm:%s332]
                  %344 = vst [vmem:[%s340 + $0x4] sm:%s332] %v343
                  %v345 = vld [vmem:[%s339 + $0x8] sm:%s332]
                  %346 = vst [vmem:[%s340 + $0x8] sm:%s332] %v345
                  %v347 = vld [vmem:[%s339 + $0xc] sm:%s332]
                  %348 = vst [vmem:[%s340 + $0xc] sm:%s332] %v347
                  %v349 = vld [vmem:[%s339 + $0x10] sm:%s332]
                  %350 = vst [vmem:[%s340 + $0x10] sm:%s332] %v349
                  %v351 = vld [vmem:[%s339 + $0x14] sm:%s332]
                  %352 = vst [vmem:[%s340 + $0x14] sm:%s332] %v351
                  %v353 = vld [vmem:[%s339 + $0x18] sm:%s332]
                  %354 = vst [vmem:[%s340 + $0x18] sm:%s332] %v353
                  %v355 = vld [vmem:[%s339 + $0x1c] sm:%s332]
                  %356 = vst [vmem:[%s340 + $0x1c] sm:%s332] %v355
                  %v357 = vld [vmem:[%s339 + $0x20] sm:%s332]
                  %358 = vst [vmem:[%s340 + $0x20] sm:%s332] %v357
                  %v359 = vld [vmem:[%s339 + $0x24] sm:%s332]
                  %360 = vst [vmem:[%s340 + $0x24] sm:%s332] %v359
                  %v361 = vld [vmem:[%s339 + $0x28] sm:%s332]
                  %362 = vst [vmem:[%s340 + $0x28] sm:%s332] %v361
                  %v363 = vld [vmem:[%s339 + $0x2c] sm:%s332]
                  %364 = vst [vmem:[%s340 + $0x2c] sm:%s332] %v363
                  %v365 = vld [vmem:[%s339 + $0x30] sm:%s332]
                  %366 = vst [vmem:[%s340 + $0x30] sm:%s332] %v365
                  %v367 = vld [vmem:[%s339 + $0x34] sm:%s332]
                  %368 = vst [vmem:[%s340 + $0x34] sm:%s332] %v367
                  %v369 = vld [vmem:[%s339 + $0x38] sm:%s332]
                  %370 = vst [vmem:[%s340 + $0x38] sm:%s332] %v369
                  %v371 = vld [vmem:[%s339 + $0x3c] sm:%s332]
                  %372 = vst [vmem:[%s340 + $0x3c] sm:%s332] %v371
                  %v373 = vld [vmem:[%s339 + $0x40] sm:%s332]
                  %374 = vst [vmem:[%s340 + $0x40] sm:%s332] %v373
                  %v375 = vld [vmem:[%s339 + $0x44] sm:%s332]
                  %376 = vst [vmem:[%s340 + $0x44] sm:%s332] %v375
                  %v377 = vld [vmem:[%s339 + $0x48] sm:%s332]
                  %378 = vst [vmem:[%s340 + $0x48] sm:%s332] %v377
                  %v379 = vld [vmem:[%s339 + $0x4c] sm:%s332]
                  %380 = vst [vmem:[%s340 + $0x4c] sm:%s332] %v379
                  %v381 = vld [vmem:[%s339 + $0x50] sm:%s332]
                  %382 = vst [vmem:[%s340 + $0x50] sm:%s332] %v381
                  %v383 = vld [vmem:[%s339 + $0x54] sm:%s332]
                  %384 = vst [vmem:[%s340 + $0x54] sm:%s332] %v383
                  %v385 = vld [vmem:[%s339 + $0x58] sm:%s332]
                  %386 = vst [vmem:[%s340 + $0x58] sm:%s332] %v385
                  %v387 = vld [vmem:[%s339 + $0x5c] sm:%s332]
                  %388 = vst [vmem:[%s340 + $0x5c] sm:%s332] %v387
                  %v389 = vld [vmem:[%s339 + $0xc0] sm:%s332]
                  %390 = vst [vmem:[%s340 + $0x60] sm:%s332] %v389
                  %v391 = vld [vmem:[%s339 + $0xc4] sm:%s332]
                  %392 = vst [vmem:[%s340 + $0x64] sm:%s332] %v391
                  %v393 = vld [vmem:[%s339 + $0xc8] sm:%s332]
                  %394 = vst [vmem:[%s340 + $0x68] sm:%s332] %v393
                  %v395 = vld [vmem:[%s339 + $0xcc] sm:%s332]
                  %396 = vst [vmem:[%s340 + $0x6c] sm:%s332] %v395
                  %v397 = vld [vmem:[%s339 + $0xd0] sm:%s332]
                  %398 = vst [vmem:[%s340 + $0x70] sm:%s332] %v397
                  %v399 = vld [vmem:[%s339 + $0xd4] sm:%s332]
                  %400 = vst [vmem:[%s340 + $0x74] sm:%s332] %v399
                  %v401 = vld [vmem:[%s339 + $0xd8] sm:%s332]
                  %402 = vst [vmem:[%s340 + $0x78] sm:%s332] %v401
                  %v403 = vld [vmem:[%s339 + $0xdc] sm:%s332]
                  %404 = vst [vmem:[%s340 + $0x7c] sm:%s332] %v403
                  %v405 = vld [vmem:[%s339 + $0xe0] sm:%s332]
                  %406 = vst [vmem:[%s340 + $0x80] sm:%s332] %v405
                  %v407 = vld [vmem:[%s339 + $0xe4] sm:%s332]
                  %408 = vst [vmem:[%s340 + $0x84] sm:%s332] %v407
                  %v409 = vld [vmem:[%s339 + $0xe8] sm:%s332]
                  %410 = vst [vmem:[%s340 + $0x88] sm:%s332] %v409
                  %v411 = vld [vmem:[%s339 + $0xec] sm:%s332]
                  %412 = vst [vmem:[%s340 + $0x8c] sm:%s332] %v411
                  %v413 = vld [vmem:[%s339 + $0xf0] sm:%s332]
                  %414 = vst [vmem:[%s340 + $0x90] sm:%s332] %v413
                  %v415 = vld [vmem:[%s339 + $0xf4] sm:%s332]
                  %416 = vst [vmem:[%s340 + $0x94] sm:%s332] %v415
                  %v417 = vld [vmem:[%s339 + $0xf8] sm:%s332]
                  %418 = vst [vmem:[%s340 + $0x98] sm:%s332] %v417
                  %v419 = vld [vmem:[%s339 + $0xfc] sm:%s332]
                  %420 = vst [vmem:[%s340 + $0x9c] sm:%s332] %v419
                  %v421 = vld [vmem:[%s339 + $0x100] sm:%s332]
                  %422 = vst [vmem:[%s340 + $0xa0] sm:%s332] %v421
                  %v423 = vld [vmem:[%s339 + $0x104] sm:%s332]
                  %424 = vst [vmem:[%s340 + $0xa4] sm:%s332] %v423
                  %v425 = vld [vmem:[%s339 + $0x108] sm:%s332]
                  %426 = vst [vmem:[%s340 + $0xa8] sm:%s332] %v425
                  %v427 = vld [vmem:[%s339 + $0x10c] sm:%s332]
                  %428 = vst [vmem:[%s340 + $0xac] sm:%s332] %v427
                  %v429 = vld [vmem:[%s339 + $0x110] sm:%s332]
                  %430 = vst [vmem:[%s340 + $0xb0] sm:%s332] %v429
                  %v431 = vld [vmem:[%s339 + $0x114] sm:%s332]
                  %432 = vst [vmem:[%s340 + $0xb4] sm:%s332] %v431
                  %v433 = vld [vmem:[%s339 + $0x118] sm:%s332]
                  %434 = vst [vmem:[%s340 + $0xb8] sm:%s332] %v433
                  %v435 = vld [vmem:[%s339 + $0x11c] sm:%s332]
                  %436 = vst [vmem:[%s340 + $0xbc] sm:%s332] %v435
                  %v437 = vld [vmem:[%s339 + $0x180] sm:%s332]
                  %438 = vst [vmem:[%s340 + $0xc0] sm:%s332] %v437
                  %v439 = vld [vmem:[%s339 + $0x184] sm:%s332]
                  %440 = vst [vmem:[%s340 + $0xc4] sm:%s332] %v439
                  %v441 = vld [vmem:[%s339 + $0x188] sm:%s332]
                  %442 = vst [vmem:[%s340 + $0xc8] sm:%s332] %v441
                  %v443 = vld [vmem:[%s339 + $0x18c] sm:%s332]
                  %444 = vst [vmem:[%s340 + $0xcc] sm:%s332] %v443
                  %v445 = vld [vmem:[%s339 + $0x190] sm:%s332]
                  %446 = vst [vmem:[%s340 + $0xd0] sm:%s332] %v445
                  %v447 = vld [vmem:[%s339 + $0x194] sm:%s332]
                  %448 = vst [vmem:[%s340 + $0xd4] sm:%s332] %v447
                  %v449 = vld [vmem:[%s339 + $0x198] sm:%s332]
                  %450 = vst [vmem:[%s340 + $0xd8] sm:%s332] %v449
                  %v451 = vld [vmem:[%s339 + $0x19c] sm:%s332]
                  %452 = vst [vmem:[%s340 + $0xdc] sm:%s332] %v451
                  %v453 = vld [vmem:[%s339 + $0x1a0] sm:%s332]
                  %454 = vst [vmem:[%s340 + $0xe0] sm:%s332] %v453
                  %v455 = vld [vmem:[%s339 + $0x1a4] sm:%s332]
                  %456 = vst [vmem:[%s340 + $0xe4] sm:%s332] %v455
                  %v457 = vld [vmem:[%s339 + $0x1a8] sm:%s332]
                  %458 = vst [vmem:[%s340 + $0xe8] sm:%s332] %v457
                  %v459 = vld [vmem:[%s339 + $0x1ac] sm:%s332]
                  %460 = vst [vmem:[%s340 + $0xec] sm:%s332] %v459
                  %v461 = vld [vmem:[%s339 + $0x1b0] sm:%s332]
                  %462 = vst [vmem:[%s340 + $0xf0] sm:%s332] %v461
                  %v463 = vld [vmem:[%s339 + $0x1b4] sm:%s332]
                  %464 = vst [vmem:[%s340 + $0xf4] sm:%s332] %v463
                  %v465 = vld [vmem:[%s339 + $0x1b8] sm:%s332]
                  %466 = vst [vmem:[%s340 + $0xf8] sm:%s332] %v465
                  %v467 = vld [vmem:[%s339 + $0x1bc] sm:%s332]
                  %468 = vst [vmem:[%s340 + $0xfc] sm:%s332] %v467
                  %v469 = vld [vmem:[%s339 + $0x1c0] sm:%s332]
                  %470 = vst [vmem:[%s340 + $0x100] sm:%s332] %v469
                  %v471 = vld [vmem:[%s339 + $0x1c4] sm:%s332]
                  %472 = vst [vmem:[%s340 + $0x104] sm:%s332] %v471
                  %v473 = vld [vmem:[%s339 + $0x1c8] sm:%s332]
                  %474 = vst [vmem:[%s340 + $0x108] sm:%s332] %v473
                  %v475 = vld [vmem:[%s339 + $0x1cc] sm:%s332]
                  %476 = vst [vmem:[%s340 + $0x10c] sm:%s332] %v475
                  %v477 = vld [vmem:[%s339 + $0x1d0] sm:%s332]
                  %478 = vst [vmem:[%s340 + $0x110] sm:%s332] %v477
                  %v479 = vld [vmem:[%s339 + $0x1d4] sm:%s332]
                  %480 = vst [vmem:[%s340 + $0x114] sm:%s332] %v479
                  %v481 = vld [vmem:[%s339 + $0x1d8] sm:%s332]
                  %482 = vst [vmem:[%s340 + $0x118] sm:%s332] %v481
                  %v483 = vld [vmem:[%s339 + $0x1dc] sm:%s332]
                  %484 = vst [vmem:[%s340 + $0x11c] sm:%s332] %v483
                $region59: #{conv_block_forward.2} parent=46 // loop_footer
                  %s338 = sadd.s32 1, %s334
                $region60: #{conv_block_forward.2} parent=46 // loop_footer_branch
                  %333 = sbr.rel target = $region56
                $region61: #{conv_block_forward.2} parent=46 // loop_exit
                  _
              $region47: #{conv_block_forward.2} parent=31 // pred_fallthru
                _
            $region32: #{conv_block_forward.2} parent=27 // pred_fallthru
              _
            // Predicated region
            $region33: #{conv_block_forward.2} parent=27 // pred_check
              _
            $region34: #{conv_block_forward.2} parent=27 // pred_check_branch
              %166 = sbr.rel (0) target = $region36
            $region35: #{conv_block_forward.2} parent=27 // pred_region
              %s168 = ssub.s32 16, 1
              loop: start=0, step=1, limit=1
              $region37: #{conv_block_forward.2} parent=35 // loop_pre_header
                _
              $region38: #{conv_block_forward.2} parent=35 // loop_header
                %s170 = sphi 0, %s174
                %p171 = scmp.ge.s32.totalorder %s170, 1
                %s175 = sphi %s160, %s160
                %s176 = sphi %s155, %s155
              $region39: #{conv_block_forward.2} parent=35 // loop_header_branch
                %173 = sbr.rel (%p171) target = $region43
              $region40: #{conv_block_forward.2} parent=35 // loop_body
                %v177 = vld [vmem:[%s175] sm:%s168]
                %178 = vst [vmem:[%s176] sm:%s168] %v177
                %v179 = vld [vmem:[%s175 + $0x4] sm:%s168]
                %180 = vst [vmem:[%s176 + $0x4] sm:%s168] %v179
                %v181 = vld [vmem:[%s175 + $0x8] sm:%s168]
                %182 = vst [vmem:[%s176 + $0x8] sm:%s168] %v181
                %v183 = vld [vmem:[%s175 + $0xc] sm:%s168]
                %184 = vst [vmem:[%s176 + $0xc] sm:%s168] %v183
                %v185 = vld [vmem:[%s175 + $0x10] sm:%s168]
                %186 = vst [vmem:[%s176 + $0x10] sm:%s168] %v185
                %v187 = vld [vmem:[%s175 + $0x14] sm:%s168]
                %188 = vst [vmem:[%s176 + $0x14] sm:%s168] %v187
                %v189 = vld [vmem:[%s175 + $0x18] sm:%s168]
                %190 = vst [vmem:[%s176 + $0x18] sm:%s168] %v189
                %v191 = vld [vmem:[%s175 + $0x1c] sm:%s168]
                %192 = vst [vmem:[%s176 + $0x1c] sm:%s168] %v191
                %v193 = vld [vmem:[%s175 + $0x20] sm:%s168]
                %194 = vst [vmem:[%s176 + $0x20] sm:%s168] %v193
                %v195 = vld [vmem:[%s175 + $0x24] sm:%s168]
                %196 = vst [vmem:[%s176 + $0x24] sm:%s168] %v195
                %v197 = vld [vmem:[%s175 + $0x28] sm:%s168]
                %198 = vst [vmem:[%s176 + $0x28] sm:%s168] %v197
                %v199 = vld [vmem:[%s175 + $0x2c] sm:%s168]
                %200 = vst [vmem:[%s176 + $0x2c] sm:%s168] %v199
                %v201 = vld [vmem:[%s175 + $0x30] sm:%s168]
                %202 = vst [vmem:[%s176 + $0x30] sm:%s168] %v201
                %v203 = vld [vmem:[%s175 + $0x34] sm:%s168]
                %204 = vst [vmem:[%s176 + $0x34] sm:%s168] %v203
                %v205 = vld [vmem:[%s175 + $0x38] sm:%s168]
                %206 = vst [vmem:[%s176 + $0x38] sm:%s168] %v205
                %v207 = vld [vmem:[%s175 + $0x3c] sm:%s168]
                %208 = vst [vmem:[%s176 + $0x3c] sm:%s168] %v207
                %v209 = vld [vmem:[%s175 + $0x40] sm:%s168]
                %210 = vst [vmem:[%s176 + $0x40] sm:%s168] %v209
                %v211 = vld [vmem:[%s175 + $0x44] sm:%s168]
                %212 = vst [vmem:[%s176 + $0x44] sm:%s168] %v211
                %v213 = vld [vmem:[%s175 + $0x48] sm:%s168]
                %214 = vst [vmem:[%s176 + $0x48] sm:%s168] %v213
                %v215 = vld [vmem:[%s175 + $0x4c] sm:%s168]
                %216 = vst [vmem:[%s176 + $0x4c] sm:%s168] %v215
                %v217 = vld [vmem:[%s175 + $0x50] sm:%s168]
                %218 = vst [vmem:[%s176 + $0x50] sm:%s168] %v217
                %v219 = vld [vmem:[%s175 + $0x54] sm:%s168]
                %220 = vst [vmem:[%s176 + $0x54] sm:%s168] %v219
                %v221 = vld [vmem:[%s175 + $0x58] sm:%s168]
                %222 = vst [vmem:[%s176 + $0x58] sm:%s168] %v221
                %v223 = vld [vmem:[%s175 + $0x5c] sm:%s168]
                %224 = vst [vmem:[%s176 + $0x5c] sm:%s168] %v223
                %v225 = vld [vmem:[%s175 + $0xc0] sm:%s168]
                %226 = vst [vmem:[%s176 + $0x60] sm:%s168] %v225
                %v227 = vld [vmem:[%s175 + $0xc4] sm:%s168]
                %228 = vst [vmem:[%s176 + $0x64] sm:%s168] %v227
                %v229 = vld [vmem:[%s175 + $0xc8] sm:%s168]
                %230 = vst [vmem:[%s176 + $0x68] sm:%s168] %v229
                %v231 = vld [vmem:[%s175 + $0xcc] sm:%s168]
                %232 = vst [vmem:[%s176 + $0x6c] sm:%s168] %v231
                %v233 = vld [vmem:[%s175 + $0xd0] sm:%s168]
                %234 = vst [vmem:[%s176 + $0x70] sm:%s168] %v233
                %v235 = vld [vmem:[%s175 + $0xd4] sm:%s168]
                %236 = vst [vmem:[%s176 + $0x74] sm:%s168] %v235
                %v237 = vld [vmem:[%s175 + $0xd8] sm:%s168]
                %238 = vst [vmem:[%s176 + $0x78] sm:%s168] %v237
                %v239 = vld [vmem:[%s175 + $0xdc] sm:%s168]
                %240 = vst [vmem:[%s176 + $0x7c] sm:%s168] %v239
                %v241 = vld [vmem:[%s175 + $0xe0] sm:%s168]
                %242 = vst [vmem:[%s176 + $0x80] sm:%s168] %v241
                %v243 = vld [vmem:[%s175 + $0xe4] sm:%s168]
                %244 = vst [vmem:[%s176 + $0x84] sm:%s168] %v243
                %v245 = vld [vmem:[%s175 + $0xe8] sm:%s168]
                %246 = vst [vmem:[%s176 + $0x88] sm:%s168] %v245
                %v247 = vld [vmem:[%s175 + $0xec] sm:%s168]
                %248 = vst [vmem:[%s176 + $0x8c] sm:%s168] %v247
                %v249 = vld [vmem:[%s175 + $0xf0] sm:%s168]
                %250 = vst [vmem:[%s176 + $0x90] sm:%s168] %v249
                %v251 = vld [vmem:[%s175 + $0xf4] sm:%s168]
                %252 = vst [vmem:[%s176 + $0x94] sm:%s168] %v251
                %v253 = vld [vmem:[%s175 + $0xf8] sm:%s168]
                %254 = vst [vmem:[%s176 + $0x98] sm:%s168] %v253
                %v255 = vld [vmem:[%s175 + $0xfc] sm:%s168]
                %256 = vst [vmem:[%s176 + $0x9c] sm:%s168] %v255
                %v257 = vld [vmem:[%s175 + $0x100] sm:%s168]
                %258 = vst [vmem:[%s176 + $0xa0] sm:%s168] %v257
                %v259 = vld [vmem:[%s175 + $0x104] sm:%s168]
                %260 = vst [vmem:[%s176 + $0xa4] sm:%s168] %v259
                %v261 = vld [vmem:[%s175 + $0x108] sm:%s168]
                %262 = vst [vmem:[%s176 + $0xa8] sm:%s168] %v261
                %v263 = vld [vmem:[%s175 + $0x10c] sm:%s168]
                %264 = vst [vmem:[%s176 + $0xac] sm:%s168] %v263
                %v265 = vld [vmem:[%s175 + $0x110] sm:%s168]
                %266 = vst [vmem:[%s176 + $0xb0] sm:%s168] %v265
                %v267 = vld [vmem:[%s175 + $0x114] sm:%s168]
                %268 = vst [vmem:[%s176 + $0xb4] sm:%s168] %v267
                %v269 = vld [vmem:[%s175 + $0x118] sm:%s168]
                %270 = vst [vmem:[%s176 + $0xb8] sm:%s168] %v269
                %v271 = vld [vmem:[%s175 + $0x11c] sm:%s168]
                %272 = vst [vmem:[%s176 + $0xbc] sm:%s168] %v271
                %v273 = vld [vmem:[%s175 + $0x180] sm:%s168]
                %274 = vst [vmem:[%s176 + $0xc0] sm:%s168] %v273
                %v275 = vld [vmem:[%s175 + $0x184] sm:%s168]
                %276 = vst [vmem:[%s176 + $0xc4] sm:%s168] %v275
                %v277 = vld [vmem:[%s175 + $0x188] sm:%s168]
                %278 = vst [vmem:[%s176 + $0xc8] sm:%s168] %v277
                %v279 = vld [vmem:[%s175 + $0x18c] sm:%s168]
                %280 = vst [vmem:[%s176 + $0xcc] sm:%s168] %v279
                %v281 = vld [vmem:[%s175 + $0x190] sm:%s168]
                %282 = vst [vmem:[%s176 + $0xd0] sm:%s168] %v281
                %v283 = vld [vmem:[%s175 + $0x194] sm:%s168]
                %284 = vst [vmem:[%s176 + $0xd4] sm:%s168] %v283
                %v285 = vld [vmem:[%s175 + $0x198] sm:%s168]
                %286 = vst [vmem:[%s176 + $0xd8] sm:%s168] %v285
                %v287 = vld [vmem:[%s175 + $0x19c] sm:%s168]
                %288 = vst [vmem:[%s176 + $0xdc] sm:%s168] %v287
                %v289 = vld [vmem:[%s175 + $0x1a0] sm:%s168]
                %290 = vst [vmem:[%s176 + $0xe0] sm:%s168] %v289
                %v291 = vld [vmem:[%s175 + $0x1a4] sm:%s168]
                %292 = vst [vmem:[%s176 + $0xe4] sm:%s168] %v291
                %v293 = vld [vmem:[%s175 + $0x1a8] sm:%s168]
                %294 = vst [vmem:[%s176 + $0xe8] sm:%s168] %v293
                %v295 = vld [vmem:[%s175 + $0x1ac] sm:%s168]
                %296 = vst [vmem:[%s176 + $0xec] sm:%s168] %v295
                %v297 = vld [vmem:[%s175 + $0x1b0] sm:%s168]
                %298 = vst [vmem:[%s176 + $0xf0] sm:%s168] %v297
                %v299 = vld [vmem:[%s175 + $0x1b4] sm:%s168]
                %300 = vst [vmem:[%s176 + $0xf4] sm:%s168] %v299
                %v301 = vld [vmem:[%s175 + $0x1b8] sm:%s168]
                %302 = vst [vmem:[%s176 + $0xf8] sm:%s168] %v301
                %v303 = vld [vmem:[%s175 + $0x1bc] sm:%s168]
                %304 = vst [vmem:[%s176 + $0xfc] sm:%s168] %v303
                %v305 = vld [vmem:[%s175 + $0x1c0] sm:%s168]
                %306 = vst [vmem:[%s176 + $0x100] sm:%s168] %v305
                %v307 = vld [vmem:[%s175 + $0x1c4] sm:%s168]
                %308 = vst [vmem:[%s176 + $0x104] sm:%s168] %v307
                %v309 = vld [vmem:[%s175 + $0x1c8] sm:%s168]
                %310 = vst [vmem:[%s176 + $0x108] sm:%s168] %v309
                %v311 = vld [vmem:[%s175 + $0x1cc] sm:%s168]
                %312 = vst [vmem:[%s176 + $0x10c] sm:%s168] %v311
                %v313 = vld [vmem:[%s175 + $0x1d0] sm:%s168]
                %314 = vst [vmem:[%s176 + $0x110] sm:%s168] %v313
                %v315 = vld [vmem:[%s175 + $0x1d4] sm:%s168]
                %316 = vst [vmem:[%s176 + $0x114] sm:%s168] %v315
                %v317 = vld [vmem:[%s175 + $0x1d8] sm:%s168]
                %318 = vst [vmem:[%s176 + $0x118] sm:%s168] %v317
                %v319 = vld [vmem:[%s175 + $0x1dc] sm:%s168]
                %320 = vst [vmem:[%s176 + $0x11c] sm:%s168] %v319
              $region41: #{conv_block_forward.2} parent=35 // loop_footer
                %s174 = sadd.s32 1, %s170
              $region42: #{conv_block_forward.2} parent=35 // loop_footer_branch
                %169 = sbr.rel target = $region38
              $region43: #{conv_block_forward.2} parent=35 // loop_exit
                _
            $region36: #{conv_block_forward.2} parent=27 // pred_fallthru
              _
          $region28: #{conv_block_forward.2} parent=23 // pred_fallthru
            _
          %485 = vnop
        $region24: #{conv_block_forward.2} parent=19 // pred_fallthru
          _
      $region20: #{conv_block_forward.2} parent=5 // pred_fallthru
        _
      %p486 = scmp.le.s32.totalorder 1, %s10
      %p487 = scmp.lt.s32.totalorder %s10, 5
      %p488 = pnand %p486, %p487
      %p489 = pneg %p488
      // Predicated region
      $region62: #{conv_block_forward.2} parent=5 // pred_check
        _
      $region63: #{conv_block_forward.2} parent=5 // pred_check_branch
        %491 = sbr.rel (%p488) target = $region65
      $region64: #{conv_block_forward.2} parent=5 // pred_region
        %s492 = ssub.s32 %s10, 1
        %s493 = sand.u32 %s37, 1
        %s494 = sand.u32 %s37, 1
        %s495 = smul.addr %s494, 288
        %s496 = scalar_lea.vmem [#allocation2], %s495
        // Predicated region
        $region66: #{conv_block_forward.2} parent=64 // pred_check
          %p497 = pneg %p50
        $region67: #{conv_block_forward.2} parent=64 // pred_check_branch
          %499 = sbr.rel (%p497) target = $region69
        $region68: #{conv_block_forward.2} parent=64 // pred_region
          _
        $region69: #{conv_block_forward.2} parent=64 // pred_fallthru
          _
        %s500 = sand.u32 %s37, 1
        %s501 = sand.u32 %s37, 1
        %s502 = smul.addr %s501, 288
        %s503 = scalar_lea.vmem [#allocation2], %s502
        %p504 = pneg %p50
        %p505 = pneg %p47
        %p506 = pneg %p71
        %p507 = pneg %p68
        %p508 = pneg %p99
        %p509 = pneg %p96
        %s510 = smul.u32 8, %s20
        %p511 = scmp.lt.s32.totalorder %s19, 1
        %s512 = scalar_select %p511, %s19, 1
        %p513 = scmp.lt.s32.totalorder %s510, 15
        %s514 = scalar_select %p513, %s510, 15
        %s515 = smul.addr %s514, 2
        %s516 = smul.addr %s512, 32
        %s517 = sadd.s32 %s515, %s516
        %s518 = smul.addr %s517, 8
        %s519 = scalar_lea.vmem %s2, %s518
        %p520 = pneg %p127
        %p521 = pneg %p124
        %p522 = scmp.lt.s32.totalorder %s19, 1
        %s523 = scalar_select %p522, %s19, 1
        %p524 = scmp.lt.s32.totalorder %s20, 1
        %s525 = scalar_select %p524, %s20, 1
        %s526 = smul.addr %s523, 2
        %s527 = sadd.s32 %s525, %s526
        %s528 = smul.addr %s527, 2
        %s529 = scalar_lea.vmem %s3, %s528
        %s530 = smul.u32 24, %s20
        %s531 = smul.u32 8, %s20
        %p532 = scmp.lt.s32.totalorder %s19, 1
        %s533 = scalar_select %p532, %s19, 1
        %p534 = scmp.lt.s32.totalorder %s531, 15
        %s535 = scalar_select %p534, %s531, 15
        %s536 = smul.addr %s535, 2
        %s537 = smul.addr %s533, 32
        %s538 = sadd.s32 %s536, %s537
        %s539 = smul.addr %s538, 8
        %s540 = scalar_lea.vmem %s2, %s539
        %s541 = smul.u32 8, %s20
        %p542 = scmp.lt.s32.totalorder %s19, 1
        %s543 = scalar_select %p542, %s19, 1
        %p544 = scmp.lt.s32.totalorder %s20, 1
        %s545 = scalar_select %p544, %s20, 1
        %s546 = smul.addr %s543, 2
        %s547 = sadd.s32 %s545, %s546
        %s548 = smul.addr %s547, 2
        %s549 = scalar_lea.vmem %s3, %s548
        %v551 = vld [vmem:[%s496] sm:$0xf]
        %v552 = vld [vmem:[%s496 + $0x4] sm:$0xf]
        %v553 = vld [vmem:[%s496 + $0x8] sm:$0xf]
        %v554 = vld [vmem:[%s496 + $0xc] sm:$0xf]
        %v555 = vld [vmem:[%s496 + $0x10] sm:$0xf]
        %v556 = vld [vmem:[%s496 + $0x14] sm:$0xf]
        %v557 = vld [vmem:[%s496 + $0x18] sm:$0xf]
        %v558 = vld [vmem:[%s496 + $0x1c] sm:$0xf]
        %v559 = vld [vmem:[%s496 + $0x20] sm:$0xf]
        %v560 = vld [vmem:[%s496 + $0x24] sm:$0xf]
        %v561 = vld [vmem:[%s496 + $0x28] sm:$0xf]
        %v562 = vld [vmem:[%s496 + $0x2c] sm:$0xf]
        %v563 = vld [vmem:[%s496 + $0x30] sm:$0xf]
        %v564 = vld [vmem:[%s496 + $0x34] sm:$0xf]
        %v565 = vld [vmem:[%s496 + $0x38] sm:$0xf]
        %v566 = vld [vmem:[%s496 + $0x3c] sm:$0xf]
        %v567 = vld [vmem:[%s496 + $0x40] sm:$0xf]
        %v568 = vld [vmem:[%s496 + $0x44] sm:$0xf]
        %v569 = vld [vmem:[%s496 + $0x48] sm:$0xf]
        %v570 = vld [vmem:[%s496 + $0x4c] sm:$0xf]
        %v571 = vld [vmem:[%s496 + $0x50] sm:$0xf]
        %v572 = vld [vmem:[%s496 + $0x54] sm:$0xf]
        %v573 = vld [vmem:[%s496 + $0x58] sm:$0xf]
        %v574 = vld [vmem:[%s496 + $0x5c] sm:$0xf]
        %v575 = vld [vmem:[%s1] sm:$0x3]
        %v600 = vunpack.c.l.b16 %v551
        %v601 = vunpack.c.l.b16 %v552
        %v602 = vunpack.c.l.b16 %v553
        %v603 = vunpack.c.l.b16 %v554
        %v604 = vunpack.c.l.b16 %v555
        %v605 = vunpack.c.l.b16 %v556
        %v606 = vunpack.c.l.b16 %v557
        %v607 = vunpack.c.l.b16 %v558
        %v608 = vunpack.c.l.b16 %v559
        %v609 = vunpack.c.l.b16 %v560
        %v610 = vunpack.c.l.b16 %v561
        %v611 = vunpack.c.l.b16 %v562
        %v612 = vunpack.c.l.b16 %v563
        %v613 = vunpack.c.l.b16 %v564
        %v614 = vunpack.c.l.b16 %v565
        %v615 = vunpack.c.l.b16 %v566
        %v616 = vunpack.c.l.b16 %v567
        %v617 = vunpack.c.l.b16 %v568
        %v618 = vunpack.c.l.b16 %v569
        %v619 = vunpack.c.l.b16 %v570
        %v620 = vunpack.c.l.b16 %v571
        %v621 = vunpack.c.l.b16 %v572
        %v622 = vunpack.c.l.b16 %v573
        %v623 = vunpack.c.l.b16 %v574
        %v624 = vpack.c.b16 %v601, %v600
        %v625 = vpack.c.b16 %v603, %v602
        %v626 = vpack.c.b16 %v605, %v604
        %v627 = vpack.c.b16 %v607, %v606
        %v628 = vpack.c.b16 %v609, %v608
        %v629 = vpack.c.b16 %v611, %v610
        %v630 = vpack.c.b16 %v613, %v612
        %v631 = vpack.c.b16 %v615, %v614
        %v632 = vpack.c.b16 %v617, %v616
        %v633 = vpack.c.b16 %v619, %v618
        %v634 = vpack.c.b16 %v621, %v620
        %v635 = vpack.c.b16 %v623, %v622
        %vm636 = vcmask 31744
        %v638 = vsel %vm636, %v624, 0
        %v641 = vsel %vm636, %v625, 0
        %v644 = vsel %vm636, %v626, 0
        %v647 = vsel %vm636, %v627, 0
        %v650 = vsel %vm636, %v628, 0
        %v653 = vsel %vm636, %v629, 0
        %v656 = vsel %vm636, %v630, 0
        %v659 = vsel %vm636, %v631, 0
        %v662 = vsel %vm636, %v632, 0
        %v665 = vsel %vm636, %v633, 0
        %v668 = vsel %vm636, %v634, 0
        %v671 = vsel %vm636, %v635, 0
        %vm673 = vcmask 1041408
        %v675 = vsel %vm673, %v575, 0
        %677 = vmatpush.bf16.msra.mxu0 0
        %678 = vmatpush.bf16.msra.mxu0 0
        %679 = vmatpush.bf16.msra.mxu0 0
        %680 = vmatpush.bf16.msra.mxu0 0
        %681 = vmatpush.bf16.msra.mxu0 0
        %682 = vmatpush.bf16.msra.mxu0 0
        %683 = vmatpush.bf16.msra.mxu0 0
        %684 = vmatpush.bf16.msra.mxu0 %v675
        %685 = vmatmul.bf16.gmra.mxu0 %v638
        %v686 = vpop.f32.mrf.mxu0
        %v687 = vadd.f32 0.0, %v686
        %v688 = vpop.f32.mrf.mxu0
        %v689 = vadd.f32 0.0, %v688
        %690 = vmatmul.bf16.gmra.mxu0 %v641
        %v691 = vpop.f32.mrf.mxu0
        %v692 = vpop.f32.mrf.mxu0
        %v693 = vadd.f32 0.0, %v692
        %694 = vmatmul.bf16.gmra.mxu0 %v644
        %v695 = vpop.f32.mrf.mxu0
        %v696 = vadd.f32 0.0, %v695
        %v697 = vpop.f32.mrf.mxu0
        %698 = vmatmul.bf16.gmra.mxu0 %v647
        %v699 = vpop.f32.mrf.mxu0
        %v700 = vadd.f32 0.0, %v699
        %v701 = vpop.f32.mrf.mxu0
        %v702 = vadd.f32 0.0, %v701
        %703 = vmatmul.bf16.gmra.mxu0 %v650
        %v704 = vpop.f32.mrf.mxu0
        %v705 = vpop.f32.mrf.mxu0
        %v706 = vadd.f32 0.0, %v705
        %707 = vmatmul.bf16.gmra.mxu0 %v653
        %v708 = vpop.f32.mrf.mxu0
        %v709 = vadd.f32 0.0, %v708
        %v710 = vpop.f32.mrf.mxu0
        %711 = vmatmul.bf16.gmra.mxu0 %v656
        %v712 = vpop.f32.mrf.mxu0
        %v713 = vadd.f32 0.0, %v712
        %v714 = vpop.f32.mrf.mxu0
        %v715 = vadd.f32 0.0, %v714
        %716 = vmatmul.bf16.gmra.mxu0 %v659
        %v717 = vpop.f32.mrf.mxu0
        %v718 = vpop.f32.mrf.mxu0
        %v719 = vadd.f32 0.0, %v718
        %720 = vmatmul.bf16.gmra.mxu0 %v662
        %v721 = vpop.f32.mrf.mxu0
        %v722 = vadd.f32 0.0, %v721
        %v723 = vpop.f32.mrf.mxu0
        %724 = vmatmul.bf16.gmra.mxu0 %v665
        %v725 = vpop.f32.mrf.mxu0
        %v726 = vadd.f32 0.0, %v725
        %v727 = vpop.f32.mrf.mxu0
        %v728 = vadd.f32 0.0, %v727
        %729 = vmatmul.bf16.gmra.mxu0 %v668
        %v730 = vpop.f32.mrf.mxu0
        %v731 = vpop.f32.mrf.mxu0
        %v732 = vadd.f32 0.0, %v731
        %733 = vmatmul.bf16.gmra.mxu0 %v671
        %v734 = vpop.f32.mrf.mxu0
        %v735 = vadd.f32 0.0, %v734
        %v736 = vpop.f32.mrf.mxu0
        %737 = vdwg.mxu0
        %v738 = vadd.f32 %v687, 0.0
        %v739 = vadd.f32 %v689, 0.0
        %v740 = vadd.f32 %v693, 0.0
        %v741 = vadd.f32 %v696, 0.0
        %v742 = vadd.f32 %v700, 0.0
        %v743 = vadd.f32 %v702, 0.0
        %v744 = vadd.f32 %v706, 0.0
        %v745 = vadd.f32 %v709, 0.0
        %v746 = vadd.f32 %v713, 0.0
        %v747 = vadd.f32 %v715, 0.0
        %v748 = vadd.f32 %v719, 0.0
        %v749 = vadd.f32 %v722, 0.0
        %v750 = vadd.f32 %v726, 0.0
        %v751 = vadd.f32 %v728, 0.0
        %v752 = vadd.f32 %v732, 0.0
        %v753 = vadd.f32 %v735, 0.0
        %s754 = scalar_lea.vmem %s1, 2
        %v755 = vld [vmem:[%s754] sm:$0x3]
        %v757 = vsel %vm673, %v755, 0
        %759 = vmatpush.bf16.msra.mxu0 0
        %760 = vmatpush.bf16.msra.mxu0 0
        %761 = vmatpush.bf16.msra.mxu0 0
        %762 = vmatpush.bf16.msra.mxu0 0
        %763 = vmatpush.bf16.msra.mxu0 0
        %764 = vmatpush.bf16.msra.mxu0 0
        %765 = vmatpush.bf16.msra.mxu0 0
        %766 = vmatpush.bf16.msra.mxu0 %v757
        %767 = vmatmul.bf16.gmra.mxu0 %v638
        %v768 = vpop.f32.mrf.mxu0
        %v769 = vadd.f32 0.0, %v768
        %v770 = vpop.f32.mrf.mxu0
        %v771 = vadd.f32 0.0, %v770
        %772 = vmatmul.bf16.gmra.mxu0 %v641
        %v773 = vpop.f32.mrf.mxu0
        %v774 = vadd.f32 0.0, %v773
        %v775 = vpop.f32.mrf.mxu0
        %v776 = vadd.f32 0.0, %v775
        %777 = vmatmul.bf16.gmra.mxu0 %v644
        %v778 = vpop.f32.mrf.mxu0
        %v779 = vadd.f32 0.0, %v778
        %v780 = vpop.f32.mrf.mxu0
        %v781 = vadd.f32 0.0, %v780
        %782 = vmatmul.bf16.gmra.mxu0 %v647
        %v783 = vpop.f32.mrf.mxu0
        %v784 = vadd.f32 0.0, %v783
        %v785 = vpop.f32.mrf.mxu0
        %v786 = vadd.f32 0.0, %v785
        %787 = vmatmul.bf16.gmra.mxu0 %v650
        %v788 = vpop.f32.mrf.mxu0
        %v789 = vadd.f32 0.0, %v788
        %v790 = vpop.f32.mrf.mxu0
        %v791 = vadd.f32 0.0, %v790
        %792 = vmatmul.bf16.gmra.mxu0 %v653
        %v793 = vpop.f32.mrf.mxu0
        %v794 = vadd.f32 0.0, %v793
        %v795 = vpop.f32.mrf.mxu0
        %v796 = vadd.f32 0.0, %v795
        %797 = vmatmul.bf16.gmra.mxu0 %v656
        %v798 = vpop.f32.mrf.mxu0
        %v799 = vadd.f32 0.0, %v798
        %v800 = vpop.f32.mrf.mxu0
        %v801 = vadd.f32 0.0, %v800
        %802 = vmatmul.bf16.gmra.mxu0 %v659
        %v803 = vpop.f32.mrf.mxu0
        %v804 = vadd.f32 0.0, %v803
        %v805 = vpop.f32.mrf.mxu0
        %v806 = vadd.f32 0.0, %v805
        %807 = vmatmul.bf16.gmra.mxu0 %v662
        %v808 = vpop.f32.mrf.mxu0
        %v809 = vadd.f32 0.0, %v808
        %v810 = vpop.f32.mrf.mxu0
        %v811 = vadd.f32 0.0, %v810
        %812 = vmatmul.bf16.gmra.mxu0 %v665
        %v813 = vpop.f32.mrf.mxu0
        %v814 = vadd.f32 0.0, %v813
        %v815 = vpop.f32.mrf.mxu0
        %v816 = vadd.f32 0.0, %v815
        %817 = vmatmul.bf16.gmra.mxu0 %v668
        %v818 = vpop.f32.mrf.mxu0
        %v819 = vadd.f32 0.0, %v818
        %v820 = vpop.f32.mrf.mxu0
        %v821 = vadd.f32 0.0, %v820
        %822 = vmatmul.bf16.gmra.mxu0 %v671
        %v823 = vpop.f32.mrf.mxu0
        %v824 = vadd.f32 0.0, %v823
        %v825 = vpop.f32.mrf.mxu0
        %v826 = vadd.f32 0.0, %v825
        %827 = vdwg.mxu0
        %vm852 = vcmask 1046528
        %v853 = vrot.slane %v769, 1
        %v854 = vrot.slane %v771, 1
        %v855 = vsel %vm852, %v853, %v854
        %v856 = vrot.slane %v774, 1
        %v857 = vsel %vm852, %v854, %v856
        %v858 = vrot.slane %v776, 1
        %v859 = vrot.slane %v779, 1
        %v860 = vsel %vm852, %v858, %v859
        %v861 = vrot.slane %v781, 1
        %v862 = vsel %vm852, %v859, %v861
        %v863 = vrot.slane %v784, 1
        %v864 = vrot.slane %v786, 1
        %v865 = vsel %vm852, %v863, %v864
        %v866 = vrot.slane %v789, 1
        %v867 = vsel %vm852, %v864, %v866
        %v868 = vrot.slane %v791, 1
        %v869 = vrot.slane %v794, 1
        %v870 = vsel %vm852, %v868, %v869
        %v871 = vrot.slane %v796, 1
        %v872 = vsel %vm852, %v869, %v871
        %v873 = vrot.slane %v799, 1
        %v874 = vrot.slane %v801, 1
        %v875 = vsel %vm852, %v873, %v874
        %v876 = vrot.slane %v804, 1
        %v877 = vsel %vm852, %v874, %v876
        %v878 = vrot.slane %v806, 1
        %v879 = vrot.slane %v809, 1
        %v880 = vsel %vm852, %v878, %v879
        %v881 = vrot.slane %v811, 1
        %v882 = vsel %vm852, %v879, %v881
        %v883 = vrot.slane %v814, 1
        %v884 = vrot.slane %v816, 1
        %v885 = vsel %vm852, %v883, %v884
        %v886 = vrot.slane %v819, 1
        %v887 = vsel %vm852, %v884, %v886
        %v888 = vrot.slane %v821, 1
        %v889 = vrot.slane %v824, 1
        %v890 = vsel %vm852, %v888, %v889
        %v891 = vrot.slane %v826, 1
        %v892 = vsel %vm852, %v889, %v891
        %v909 = vadd.f32 %v738, %v855
        %v910 = vadd.f32 %v739, %v857
        %v911 = vadd.f32 %v740, %v860
        %v912 = vadd.f32 %v741, %v862
        %v913 = vadd.f32 %v742, %v865
        %v914 = vadd.f32 %v743, %v867
        %v915 = vadd.f32 %v744, %v870
        %v916 = vadd.f32 %v745, %v872
        %v917 = vadd.f32 %v746, %v875
        %v918 = vadd.f32 %v747, %v877
        %v919 = vadd.f32 %v748, %v880
        %v920 = vadd.f32 %v749, %v882
        %v921 = vadd.f32 %v750, %v885
        %v922 = vadd.f32 %v751, %v887
        %v923 = vadd.f32 %v752, %v890
        %v924 = vadd.f32 %v753, %v892
        %s925 = scalar_lea.vmem %s1, 4
        %v926 = vld [vmem:[%s925] sm:$0x3]
        %v928 = vsel %vm673, %v926, 0
        %930 = vmatpush.bf16.msra.mxu0 0
        %931 = vmatpush.bf16.msra.mxu0 0
        %932 = vmatpush.bf16.msra.mxu0 0
        %933 = vmatpush.bf16.msra.mxu0 0
        %934 = vmatpush.bf16.msra.mxu0 0
        %935 = vmatpush.bf16.msra.mxu0 0
        %936 = vmatpush.bf16.msra.mxu0 0
        %937 = vmatpush.bf16.msra.mxu0 %v928
        %938 = vmatmul.bf16.gmra.mxu0 %v638
        %v939 = vpop.f32.mrf.mxu0
        %v940 = vadd.f32 0.0, %v939
        %v941 = vpop.f32.mrf.mxu0
        %v942 = vadd.f32 0.0, %v941
        %943 = vmatmul.bf16.gmra.mxu0 %v641
        %v944 = vpop.f32.mrf.mxu0
        %v945 = vadd.f32 0.0, %v944
        %v946 = vpop.f32.mrf.mxu0
        %v947 = vadd.f32 0.0, %v946
        %948 = vmatmul.bf16.gmra.mxu0 %v644
        %v949 = vpop.f32.mrf.mxu0
        %v950 = vadd.f32 0.0, %v949
        %v951 = vpop.f32.mrf.mxu0
        %v952 = vadd.f32 0.0, %v951
        %953 = vmatmul.bf16.gmra.mxu0 %v647
        %v954 = vpop.f32.mrf.mxu0
        %v955 = vadd.f32 0.0, %v954
        %v956 = vpop.f32.mrf.mxu0
        %v957 = vadd.f32 0.0, %v956
        %958 = vmatmul.bf16.gmra.mxu0 %v650
        %v959 = vpop.f32.mrf.mxu0
        %v960 = vadd.f32 0.0, %v959
        %v961 = vpop.f32.mrf.mxu0
        %v962 = vadd.f32 0.0, %v961
        %963 = vmatmul.bf16.gmra.mxu0 %v653
        %v964 = vpop.f32.mrf.mxu0
        %v965 = vadd.f32 0.0, %v964
        %v966 = vpop.f32.mrf.mxu0
        %v967 = vadd.f32 0.0, %v966
        %968 = vmatmul.bf16.gmra.mxu0 %v656
        %v969 = vpop.f32.mrf.mxu0
        %v970 = vadd.f32 0.0, %v969
        %v971 = vpop.f32.mrf.mxu0
        %v972 = vadd.f32 0.0, %v971
        %973 = vmatmul.bf16.gmra.mxu0 %v659
        %v974 = vpop.f32.mrf.mxu0
        %v975 = vadd.f32 0.0, %v974
        %v976 = vpop.f32.mrf.mxu0
        %v977 = vadd.f32 0.0, %v976
        %978 = vmatmul.bf16.gmra.mxu0 %v662
        %v979 = vpop.f32.mrf.mxu0
        %v980 = vadd.f32 0.0, %v979
        %v981 = vpop.f32.mrf.mxu0
        %v982 = vadd.f32 0.0, %v981
        %983 = vmatmul.bf16.gmra.mxu0 %v665
        %v984 = vpop.f32.mrf.mxu0
        %v985 = vadd.f32 0.0, %v984
        %v986 = vpop.f32.mrf.mxu0
        %v987 = vadd.f32 0.0, %v986
        %988 = vmatmul.bf16.gmra.mxu0 %v668
        %v989 = vpop.f32.mrf.mxu0
        %v990 = vadd.f32 0.0, %v989
        %v991 = vpop.f32.mrf.mxu0
        %v992 = vadd.f32 0.0, %v991
        %993 = vmatmul.bf16.gmra.mxu0 %v671
        %v994 = vpop.f32.mrf.mxu0
        %v995 = vadd.f32 0.0, %v994
        %v996 = vpop.f32.mrf.mxu0
        %v997 = vadd.f32 0.0, %v996
        %998 = vdwg.mxu0
        %vm1023 = vcmask 1045504
        %v1024 = vrot.slane %v940, 2
        %v1025 = vrot.slane %v942, 2
        %v1026 = vsel %vm1023, %v1024, %v1025
        %v1027 = vrot.slane %v945, 2
        %v1028 = vsel %vm1023, %v1025, %v1027
        %v1029 = vrot.slane %v947, 2
        %v1030 = vrot.slane %v950, 2
        %v1031 = vsel %vm1023, %v1029, %v1030
        %v1032 = vrot.slane %v952, 2
        %v1033 = vsel %vm1023, %v1030, %v1032
        %v1034 = vrot.slane %v955, 2
        %v1035 = vrot.slane %v957, 2
        %v1036 = vsel %vm1023, %v1034, %v1035
        %v1037 = vrot.slane %v960, 2
        %v1038 = vsel %vm1023, %v1035, %v1037
        %v1039 = vrot.slane %v962, 2
        %v1040 = vrot.slane %v965, 2
        %v1041 = vsel %vm1023, %v1039, %v1040
        %v1042 = vrot.slane %v967, 2
        %v1043 = vsel %vm1023, %v1040, %v1042
        %v1044 = vrot.slane %v970, 2
        %v1045 = vrot.slane %v972, 2
        %v1046 = vsel %vm1023, %v1044, %v1045
        %v1047 = vrot.slane %v975, 2
        %v1048 = vsel %vm1023, %v1045, %v1047
        %v1049 = vrot.slane %v977, 2
        %v1050 = vrot.slane %v980, 2
        %v1051 = vsel %vm1023, %v1049, %v1050
        %v1052 = vrot.slane %v982, 2
        %v1053 = vsel %vm1023, %v1050, %v1052
        %v1054 = vrot.slane %v985, 2
        %v1055 = vrot.slane %v987, 2
        %v1056 = vsel %vm1023, %v1054, %v1055
        %v1057 = vrot.slane %v990, 2
        %v1058 = vsel %vm1023, %v1055, %v1057
        %v1059 = vrot.slane %v992, 2
        %v1060 = vrot.slane %v995, 2
        %v1061 = vsel %vm1023, %v1059, %v1060
        %v1062 = vrot.slane %v997, 2
        %v1063 = vsel %vm1023, %v1060, %v1062
        %v1080 = vadd.f32 %v909, %v1026
        %v1081 = vadd.f32 %v910, %v1028
        %v1082 = vadd.f32 %v911, %v1031
        %v1083 = vadd.f32 %v912, %v1033
        %v1084 = vadd.f32 %v913, %v1036
        %v1085 = vadd.f32 %v914, %v1038
        %v1086 = vadd.f32 %v915, %v1041
        %v1087 = vadd.f32 %v916, %v1043
        %v1088 = vadd.f32 %v917, %v1046
        %v1089 = vadd.f32 %v918, %v1048
        %v1090 = vadd.f32 %v919, %v1051
        %v1091 = vadd.f32 %v920, %v1053
        %v1092 = vadd.f32 %v921, %v1056
        %v1093 = vadd.f32 %v922, %v1058
        %v1094 = vadd.f32 %v923, %v1061
        %v1095 = vadd.f32 %v924, %v1063
        %s1096 = scalar_lea.vmem %s496, 96 [#allocation2]
        %v1097 = vld [vmem:[%s1096] sm:$0xf]
        %v1098 = vld [vmem:[%s1096 + $0x4] sm:$0xf]
        %v1099 = vld [vmem:[%s1096 + $0x8] sm:$0xf]
        %v1100 = vld [vmem:[%s1096 + $0xc] sm:$0xf]
        %v1101 = vld [vmem:[%s1096 + $0x10] sm:$0xf]
        %v1102 = vld [vmem:[%s1096 + $0x14] sm:$0xf]
        %v1103 = vld [vmem:[%s1096 + $0x18] sm:$0xf]
        %v1104 = vld [vmem:[%s1096 + $0x1c] sm:$0xf]
        %v1105 = vld [vmem:[%s1096 + $0x20] sm:$0xf]
        %v1106 = vld [vmem:[%s1096 + $0x24] sm:$0xf]
        %v1107 = vld [vmem:[%s1096 + $0x28] sm:$0xf]
        %v1108 = vld [vmem:[%s1096 + $0x2c] sm:$0xf]
        %v1109 = vld [vmem:[%s1096 + $0x30] sm:$0xf]
        %v1110 = vld [vmem:[%s1096 + $0x34] sm:$0xf]
        %v1111 = vld [vmem:[%s1096 + $0x38] sm:$0xf]
        %v1112 = vld [vmem:[%s1096 + $0x3c] sm:$0xf]
        %v1113 = vld [vmem:[%s1096 + $0x40] sm:$0xf]
        %v1114 = vld [vmem:[%s1096 + $0x44] sm:$0xf]
        %v1115 = vld [vmem:[%s1096 + $0x48] sm:$0xf]
        %v1116 = vld [vmem:[%s1096 + $0x4c] sm:$0xf]
        %v1117 = vld [vmem:[%s1096 + $0x50] sm:$0xf]
        %v1118 = vld [vmem:[%s1096 + $0x54] sm:$0xf]
        %v1119 = vld [vmem:[%s1096 + $0x58] sm:$0xf]
        %v1120 = vld [vmem:[%s1096 + $0x5c] sm:$0xf]
        %s1121 = scalar_lea.vmem %s1, 6
        %v1122 = vld [vmem:[%s1121] sm:$0x3]
        %v1147 = vunpack.c.l.b16 %v1097
        %v1148 = vunpack.c.l.b16 %v1098
        %v1149 = vunpack.c.l.b16 %v1099
        %v1150 = vunpack.c.l.b16 %v1100
        %v1151 = vunpack.c.l.b16 %v1101
        %v1152 = vunpack.c.l.b16 %v1102
        %v1153 = vunpack.c.l.b16 %v1103
        %v1154 = vunpack.c.l.b16 %v1104
        %v1155 = vunpack.c.l.b16 %v1105
        %v1156 = vunpack.c.l.b16 %v1106
        %v1157 = vunpack.c.l.b16 %v1107
        %v1158 = vunpack.c.l.b16 %v1108
        %v1159 = vunpack.c.l.b16 %v1109
        %v1160 = vunpack.c.l.b16 %v1110
        %v1161 = vunpack.c.l.b16 %v1111
        %v1162 = vunpack.c.l.b16 %v1112
        %v1163 = vunpack.c.l.b16 %v1113
        %v1164 = vunpack.c.l.b16 %v1114
        %v1165 = vunpack.c.l.b16 %v1115
        %v1166 = vunpack.c.l.b16 %v1116
        %v1167 = vunpack.c.l.b16 %v1117
        %v1168 = vunpack.c.l.b16 %v1118
        %v1169 = vunpack.c.l.b16 %v1119
        %v1170 = vunpack.c.l.b16 %v1120
        %v1171 = vpack.c.b16 %v1148, %v1147
        %v1172 = vpack.c.b16 %v1150, %v1149
        %v1173 = vpack.c.b16 %v1152, %v1151
        %v1174 = vpack.c.b16 %v1154, %v1153
        %v1175 = vpack.c.b16 %v1156, %v1155
        %v1176 = vpack.c.b16 %v1158, %v1157
        %v1177 = vpack.c.b16 %v1160, %v1159
        %v1178 = vpack.c.b16 %v1162, %v1161
        %v1179 = vpack.c.b16 %v1164, %v1163
        %v1180 = vpack.c.b16 %v1166, %v1165
        %v1181 = vpack.c.b16 %v1168, %v1167
        %v1182 = vpack.c.b16 %v1170, %v1169
        %v1184 = vsel %vm636, %v1171, 0
        %v1187 = vsel %vm636, %v1172, 0
        %v1190 = vsel %vm636, %v1173, 0
        %v1193 = vsel %vm636, %v1174, 0
        %v1196 = vsel %vm636, %v1175, 0
        %v1199 = vsel %vm636, %v1176, 0
        %v1202 = vsel %vm636, %v1177, 0
        %v1205 = vsel %vm636, %v1178, 0
        %v1208 = vsel %vm636, %v1179, 0
        %v1211 = vsel %vm636, %v1180, 0
        %v1214 = vsel %vm636, %v1181, 0
        %v1217 = vsel %vm636, %v1182, 0
        %v1220 = vsel %vm673, %v1122, 0
        %1222 = vmatpush.bf16.msra.mxu0 0
        %1223 = vmatpush.bf16.msra.mxu0 0
        %1224 = vmatpush.bf16.msra.mxu0 0
        %1225 = vmatpush.bf16.msra.mxu0 0
        %1226 = vmatpush.bf16.msra.mxu0 0
        %1227 = vmatpush.bf16.msra.mxu0 0
        %1228 = vmatpush.bf16.msra.mxu0 0
        %1229 = vmatpush.bf16.msra.mxu0 %v1220
        %1230 = vmatmul.bf16.gmra.mxu0 %v1184
        %v1231 = vpop.f32.mrf.mxu0
        %v1232 = vadd.f32 0.0, %v1231
        %v1233 = vpop.f32.mrf.mxu0
        %v1234 = vadd.f32 0.0, %v1233
        %1235 = vmatmul.bf16.gmra.mxu0 %v1187
        %v1236 = vpop.f32.mrf.mxu0
        %v1237 = vpop.f32.mrf.mxu0
        %v1238 = vadd.f32 0.0, %v1237
        %1239 = vmatmul.bf16.gmra.mxu0 %v1190
        %v1240 = vpop.f32.mrf.mxu0
        %v1241 = vadd.f32 0.0, %v1240
        %v1242 = vpop.f32.mrf.mxu0
        %1243 = vmatmul.bf16.gmra.mxu0 %v1193
        %v1244 = vpop.f32.mrf.mxu0
        %v1245 = vadd.f32 0.0, %v1244
        %v1246 = vpop.f32.mrf.mxu0
        %v1247 = vadd.f32 0.0, %v1246
        %1248 = vmatmul.bf16.gmra.mxu0 %v1196
        %v1249 = vpop.f32.mrf.mxu0
        %v1250 = vpop.f32.mrf.mxu0
        %v1251 = vadd.f32 0.0, %v1250
        %1252 = vmatmul.bf16.gmra.mxu0 %v1199
        %v1253 = vpop.f32.mrf.mxu0
        %v1254 = vadd.f32 0.0, %v1253
        %v1255 = vpop.f32.mrf.mxu0
        %1256 = vmatmul.bf16.gmra.mxu0 %v1202
        %v1257 = vpop.f32.mrf.mxu0
        %v1258 = vadd.f32 0.0, %v1257
        %v1259 = vpop.f32.mrf.mxu0
        %v1260 = vadd.f32 0.0, %v1259
        %1261 = vmatmul.bf16.gmra.mxu0 %v1205
        %v1262 = vpop.f32.mrf.mxu0
        %v1263 = vpop.f32.mrf.mxu0
        %v1264 = vadd.f32 0.0, %v1263
        %1265 = vmatmul.bf16.gmra.mxu0 %v1208
        %v1266 = vpop.f32.mrf.mxu0
        %v1267 = vadd.f32 0.0, %v1266
        %v1268 = vpop.f32.mrf.mxu0
        %1269 = vmatmul.bf16.gmra.mxu0 %v1211
        %v1270 = vpop.f32.mrf.mxu0
        %v1271 = vadd.f32 0.0, %v1270
        %v1272 = vpop.f32.mrf.mxu0
        %v1273 = vadd.f32 0.0, %v1272
        %1274 = vmatmul.bf16.gmra.mxu0 %v1214
        %v1275 = vpop.f32.mrf.mxu0
        %v1276 = vpop.f32.mrf.mxu0
        %v1277 = vadd.f32 0.0, %v1276
        %1278 = vmatmul.bf16.gmra.mxu0 %v1217
        %v1279 = vpop.f32.mrf.mxu0
        %v1280 = vadd.f32 0.0, %v1279
        %v1281 = vpop.f32.mrf.mxu0
        %1282 = vdwg.mxu0
        %v1283 = vadd.f32 %v1080, %v1232
        %v1284 = vadd.f32 %v1081, %v1234
        %v1285 = vadd.f32 %v1082, %v1238
        %v1286 = vadd.f32 %v1083, %v1241
        %v1287 = vadd.f32 %v1084, %v1245
        %v1288 = vadd.f32 %v1085, %v1247
        %v1289 = vadd.f32 %v1086, %v1251
        %v1290 = vadd.f32 %v1087, %v1254
        %v1291 = vadd.f32 %v1088, %v1258
        %v1292 = vadd.f32 %v1089, %v1260
        %v1293 = vadd.f32 %v1090, %v1264
        %v1294 = vadd.f32 %v1091, %v1267
        %v1295 = vadd.f32 %v1092, %v1271
        %v1296 = vadd.f32 %v1093, %v1273
        %v1297 = vadd.f32 %v1094, %v1277
        %v1298 = vadd.f32 %v1095, %v1280
        %s1299 = scalar_lea.vmem %s1, 8
        %v1300 = vld [vmem:[%s1299] sm:$0x3]
        %v1302 = vsel %vm673, %v1300, 0
        %1304 = vmatpush.bf16.msra.mxu0 0
        %1305 = vmatpush.bf16.msra.mxu0 0
        %1306 = vmatpush.bf16.msra.mxu0 0
        %1307 = vmatpush.bf16.msra.mxu0 0
        %1308 = vmatpush.bf16.msra.mxu0 0
        %1309 = vmatpush.bf16.msra.mxu0 0
        %1310 = vmatpush.bf16.msra.mxu0 0
        %1311 = vmatpush.bf16.msra.mxu0 %v1302
        %1312 = vmatmul.bf16.gmra.mxu0 %v1184
        %v1313 = vpop.f32.mrf.mxu0
        %v1314 = vadd.f32 0.0, %v1313
        %v1315 = vpop.f32.mrf.mxu0
        %v1316 = vadd.f32 0.0, %v1315
        %1317 = vmatmul.bf16.gmra.mxu0 %v1187
        %v1318 = vpop.f32.mrf.mxu0
        %v1319 = vadd.f32 0.0, %v1318
        %v1320 = vpop.f32.mrf.mxu0
        %v1321 = vadd.f32 0.0, %v1320
        %1322 = vmatmul.bf16.gmra.mxu0 %v1190
        %v1323 = vpop.f32.mrf.mxu0
        %v1324 = vadd.f32 0.0, %v1323
        %v1325 = vpop.f32.mrf.mxu0
        %v1326 = vadd.f32 0.0, %v1325
        %1327 = vmatmul.bf16.gmra.mxu0 %v1193
        %v1328 = vpop.f32.mrf.mxu0
        %v1329 = vadd.f32 0.0, %v1328
        %v1330 = vpop.f32.mrf.mxu0
        %v1331 = vadd.f32 0.0, %v1330
        %1332 = vmatmul.bf16.gmra.mxu0 %v1196
        %v1333 = vpop.f32.mrf.mxu0
        %v1334 = vadd.f32 0.0, %v1333
        %v1335 = vpop.f32.mrf.mxu0
        %v1336 = vadd.f32 0.0, %v1335
        %1337 = vmatmul.bf16.gmra.mxu0 %v1199
        %v1338 = vpop.f32.mrf.mxu0
        %v1339 = vadd.f32 0.0, %v1338
        %v1340 = vpop.f32.mrf.mxu0
        %v1341 = vadd.f32 0.0, %v1340
        %1342 = vmatmul.bf16.gmra.mxu0 %v1202
        %v1343 = vpop.f32.mrf.mxu0
        %v1344 = vadd.f32 0.0, %v1343
        %v1345 = vpop.f32.mrf.mxu0
        %v1346 = vadd.f32 0.0, %v1345
        %1347 = vmatmul.bf16.gmra.mxu0 %v1205
        %v1348 = vpop.f32.mrf.mxu0
        %v1349 = vadd.f32 0.0, %v1348
        %v1350 = vpop.f32.mrf.mxu0
        %v1351 = vadd.f32 0.0, %v1350
        %1352 = vmatmul.bf16.gmra.mxu0 %v1208
        %v1353 = vpop.f32.mrf.mxu0
        %v1354 = vadd.f32 0.0, %v1353
        %v1355 = vpop.f32.mrf.mxu0
        %v1356 = vadd.f32 0.0, %v1355
        %1357 = vmatmul.bf16.gmra.mxu0 %v1211
        %v1358 = vpop.f32.mrf.mxu0
        %v1359 = vadd.f32 0.0, %v1358
        %v1360 = vpop.f32.mrf.mxu0
        %v1361 = vadd.f32 0.0, %v1360
        %1362 = vmatmul.bf16.gmra.mxu0 %v1214
        %v1363 = vpop.f32.mrf.mxu0
        %v1364 = vadd.f32 0.0, %v1363
        %v1365 = vpop.f32.mrf.mxu0
        %v1366 = vadd.f32 0.0, %v1365
        %1367 = vmatmul.bf16.gmra.mxu0 %v1217
        %v1368 = vpop.f32.mrf.mxu0
        %v1369 = vadd.f32 0.0, %v1368
        %v1370 = vpop.f32.mrf.mxu0
        %v1371 = vadd.f32 0.0, %v1370
        %1372 = vdwg.mxu0
        %v1397 = vrot.slane %v1314, 1
        %v1398 = vrot.slane %v1316, 1
        %v1399 = vsel %vm852, %v1397, %v1398
        %v1400 = vrot.slane %v1319, 1
        %v1401 = vsel %vm852, %v1398, %v1400
        %v1402 = vrot.slane %v1321, 1
        %v1403 = vrot.slane %v1324, 1
        %v1404 = vsel %vm852, %v1402, %v1403
        %v1405 = vrot.slane %v1326, 1
        %v1406 = vsel %vm852, %v1403, %v1405
        %v1407 = vrot.slane %v1329, 1
        %v1408 = vrot.slane %v1331, 1
        %v1409 = vsel %vm852, %v1407, %v1408
        %v1410 = vrot.slane %v1334, 1
        %v1411 = vsel %vm852, %v1408, %v1410
        %v1412 = vrot.slane %v1336, 1
        %v1413 = vrot.slane %v1339, 1
        %v1414 = vsel %vm852, %v1412, %v1413
        %v1415 = vrot.slane %v1341, 1
        %v1416 = vsel %vm852, %v1413, %v1415
        %v1417 = vrot.slane %v1344, 1
        %v1418 = vrot.slane %v1346, 1
        %v1419 = vsel %vm852, %v1417, %v1418
        %v1420 = vrot.slane %v1349, 1
        %v1421 = vsel %vm852, %v1418, %v1420
        %v1422 = vrot.slane %v1351, 1
        %v1423 = vrot.slane %v1354, 1
        %v1424 = vsel %vm852, %v1422, %v1423
        %v1425 = vrot.slane %v1356, 1
        %v1426 = vsel %vm852, %v1423, %v1425
        %v1427 = vrot.slane %v1359, 1
        %v1428 = vrot.slane %v1361, 1
        %v1429 = vsel %vm852, %v1427, %v1428
        %v1430 = vrot.slane %v1364, 1
        %v1431 = vsel %vm852, %v1428, %v1430
        %v1432 = vrot.slane %v1366, 1
        %v1433 = vrot.slane %v1369, 1
        %v1434 = vsel %vm852, %v1432, %v1433
        %v1435 = vrot.slane %v1371, 1
        %v1436 = vsel %vm852, %v1433, %v1435
        %v1453 = vadd.f32 %v1283, %v1399
        %v1454 = vadd.f32 %v1284, %v1401
        %v1455 = vadd.f32 %v1285, %v1404
        %v1456 = vadd.f32 %v1286, %v1406
        %v1457 = vadd.f32 %v1287, %v1409
        %v1458 = vadd.f32 %v1288, %v1411
        %v1459 = vadd.f32 %v1289, %v1414
        %v1460 = vadd.f32 %v1290, %v1416
        %v1461 = vadd.f32 %v1291, %v1419
        %v1462 = vadd.f32 %v1292, %v1421
        %v1463 = vadd.f32 %v1293, %v1424
        %v1464 = vadd.f32 %v1294, %v1426
        %v1465 = vadd.f32 %v1295, %v1429
        %v1466 = vadd.f32 %v1296, %v1431
        %v1467 = vadd.f32 %v1297, %v1434
        %v1468 = vadd.f32 %v1298, %v1436
        %s1469 = scalar_lea.vmem %s1, 10
        %v1470 = vld [vmem:[%s1469] sm:$0x3]
        %v1472 = vsel %vm673, %v1470, 0
        %1474 = vmatpush.bf16.msra.mxu0 0
        %1475 = vmatpush.bf16.msra.mxu0 0
        %1476 = vmatpush.bf16.msra.mxu0 0
        %1477 = vmatpush.bf16.msra.mxu0 0
        %1478 = vmatpush.bf16.msra.mxu0 0
        %1479 = vmatpush.bf16.msra.mxu0 0
        %1480 = vmatpush.bf16.msra.mxu0 0
        %1481 = vmatpush.bf16.msra.mxu0 %v1472
        %1482 = vmatmul.bf16.gmra.mxu0 %v1184
        %v1483 = vpop.f32.mrf.mxu0
        %v1484 = vadd.f32 0.0, %v1483
        %v1485 = vpop.f32.mrf.mxu0
        %v1486 = vadd.f32 0.0, %v1485
        %1487 = vmatmul.bf16.gmra.mxu0 %v1187
        %v1488 = vpop.f32.mrf.mxu0
        %v1489 = vadd.f32 0.0, %v1488
        %v1490 = vpop.f32.mrf.mxu0
        %v1491 = vadd.f32 0.0, %v1490
        %1492 = vmatmul.bf16.gmra.mxu0 %v1190
        %v1493 = vpop.f32.mrf.mxu0
        %v1494 = vadd.f32 0.0, %v1493
        %v1495 = vpop.f32.mrf.mxu0
        %v1496 = vadd.f32 0.0, %v1495
        %1497 = vmatmul.bf16.gmra.mxu0 %v1193
        %v1498 = vpop.f32.mrf.mxu0
        %v1499 = vadd.f32 0.0, %v1498
        %v1500 = vpop.f32.mrf.mxu0
        %v1501 = vadd.f32 0.0, %v1500
        %1502 = vmatmul.bf16.gmra.mxu0 %v1196
        %v1503 = vpop.f32.mrf.mxu0
        %v1504 = vadd.f32 0.0, %v1503
        %v1505 = vpop.f32.mrf.mxu0
        %v1506 = vadd.f32 0.0, %v1505
        %1507 = vmatmul.bf16.gmra.mxu0 %v1199
        %v1508 = vpop.f32.mrf.mxu0
        %v1509 = vadd.f32 0.0, %v1508
        %v1510 = vpop.f32.mrf.mxu0
        %v1511 = vadd.f32 0.0, %v1510
        %1512 = vmatmul.bf16.gmra.mxu0 %v1202
        %v1513 = vpop.f32.mrf.mxu0
        %v1514 = vadd.f32 0.0, %v1513
        %v1515 = vpop.f32.mrf.mxu0
        %v1516 = vadd.f32 0.0, %v1515
        %1517 = vmatmul.bf16.gmra.mxu0 %v1205
        %v1518 = vpop.f32.mrf.mxu0
        %v1519 = vadd.f32 0.0, %v1518
        %v1520 = vpop.f32.mrf.mxu0
        %v1521 = vadd.f32 0.0, %v1520
        %1522 = vmatmul.bf16.gmra.mxu0 %v1208
        %v1523 = vpop.f32.mrf.mxu0
        %v1524 = vadd.f32 0.0, %v1523
        %v1525 = vpop.f32.mrf.mxu0
        %v1526 = vadd.f32 0.0, %v1525
        %1527 = vmatmul.bf16.gmra.mxu0 %v1211
        %v1528 = vpop.f32.mrf.mxu0
        %v1529 = vadd.f32 0.0, %v1528
        %v1530 = vpop.f32.mrf.mxu0
        %v1531 = vadd.f32 0.0, %v1530
        %1532 = vmatmul.bf16.gmra.mxu0 %v1214
        %v1533 = vpop.f32.mrf.mxu0
        %v1534 = vadd.f32 0.0, %v1533
        %v1535 = vpop.f32.mrf.mxu0
        %v1536 = vadd.f32 0.0, %v1535
        %1537 = vmatmul.bf16.gmra.mxu0 %v1217
        %v1538 = vpop.f32.mrf.mxu0
        %v1539 = vadd.f32 0.0, %v1538
        %v1540 = vpop.f32.mrf.mxu0
        %v1541 = vadd.f32 0.0, %v1540
        %1542 = vdwg.mxu0
        %v1567 = vrot.slane %v1484, 2
        %v1568 = vrot.slane %v1486, 2
        %v1569 = vsel %vm1023, %v1567, %v1568
        %v1570 = vrot.slane %v1489, 2
        %v1571 = vsel %vm1023, %v1568, %v1570
        %v1572 = vrot.slane %v1491, 2
        %v1573 = vrot.slane %v1494, 2
        %v1574 = vsel %vm1023, %v1572, %v1573
        %v1575 = vrot.slane %v1496, 2
        %v1576 = vsel %vm1023, %v1573, %v1575
        %v1577 = vrot.slane %v1499, 2
        %v1578 = vrot.slane %v1501, 2
        %v1579 = vsel %vm1023, %v1577, %v1578
        %v1580 = vrot.slane %v1504, 2
        %v1581 = vsel %vm1023, %v1578, %v1580
        %v1582 = vrot.slane %v1506, 2
        %v1583 = vrot.slane %v1509, 2
        %v1584 = vsel %vm1023, %v1582, %v1583
        %v1585 = vrot.slane %v1511, 2
        %v1586 = vsel %vm1023, %v1583, %v1585
        %v1587 = vrot.slane %v1514, 2
        %v1588 = vrot.slane %v1516, 2
        %v1589 = vsel %vm1023, %v1587, %v1588
        %v1590 = vrot.slane %v1519, 2
        %v1591 = vsel %vm1023, %v1588, %v1590
        %v1592 = vrot.slane %v1521, 2
        %v1593 = vrot.slane %v1524, 2
        %v1594 = vsel %vm1023, %v1592, %v1593
        %v1595 = vrot.slane %v1526, 2
        %v1596 = vsel %vm1023, %v1593, %v1595
        %v1597 = vrot.slane %v1529, 2
        %v1598 = vrot.slane %v1531, 2
        %v1599 = vsel %vm1023, %v1597, %v1598
        %v1600 = vrot.slane %v1534, 2
        %v1601 = vsel %vm1023, %v1598, %v1600
        %v1602 = vrot.slane %v1536, 2
        %v1603 = vrot.slane %v1539, 2
        %v1604 = vsel %vm1023, %v1602, %v1603
        %v1605 = vrot.slane %v1541, 2
        %v1606 = vsel %vm1023, %v1603, %v1605
        %v1623 = vadd.f32 %v1453, %v1569
        %v1624 = vadd.f32 %v1454, %v1571
        %v1625 = vadd.f32 %v1455, %v1574
        %v1626 = vadd.f32 %v1456, %v1576
        %v1627 = vadd.f32 %v1457, %v1579
        %v1628 = vadd.f32 %v1458, %v1581
        %v1629 = vadd.f32 %v1459, %v1584
        %v1630 = vadd.f32 %v1460, %v1586
        %v1631 = vadd.f32 %v1461, %v1589
        %v1632 = vadd.f32 %v1462, %v1591
        %v1633 = vadd.f32 %v1463, %v1594
        %v1634 = vadd.f32 %v1464, %v1596
        %v1635 = vadd.f32 %v1465, %v1599
        %v1636 = vadd.f32 %v1466, %v1601
        %v1637 = vadd.f32 %v1467, %v1604
        %v1638 = vadd.f32 %v1468, %v1606
        %s1639 = scalar_lea.vmem %s496, 192 [#allocation2]
        %v1640 = vld [vmem:[%s1639] sm:$0xf]
        %v1641 = vld [vmem:[%s1639 + $0x4] sm:$0xf]
        %v1642 = vld [vmem:[%s1639 + $0x8] sm:$0xf]
        %v1643 = vld [vmem:[%s1639 + $0xc] sm:$0xf]
        %v1644 = vld [vmem:[%s1639 + $0x10] sm:$0xf]
        %v1645 = vld [vmem:[%s1639 + $0x14] sm:$0xf]
        %v1646 = vld [vmem:[%s1639 + $0x18] sm:$0xf]
        %v1647 = vld [vmem:[%s1639 + $0x1c] sm:$0xf]
        %v1648 = vld [vmem:[%s1639 + $0x20] sm:$0xf]
        %v1649 = vld [vmem:[%s1639 + $0x24] sm:$0xf]
        %v1650 = vld [vmem:[%s1639 + $0x28] sm:$0xf]
        %v1651 = vld [vmem:[%s1639 + $0x2c] sm:$0xf]
        %v1652 = vld [vmem:[%s1639 + $0x30] sm:$0xf]
        %v1653 = vld [vmem:[%s1639 + $0x34] sm:$0xf]
        %v1654 = vld [vmem:[%s1639 + $0x38] sm:$0xf]
        %v1655 = vld [vmem:[%s1639 + $0x3c] sm:$0xf]
        %v1656 = vld [vmem:[%s1639 + $0x40] sm:$0xf]
        %v1657 = vld [vmem:[%s1639 + $0x44] sm:$0xf]
        %v1658 = vld [vmem:[%s1639 + $0x48] sm:$0xf]
        %v1659 = vld [vmem:[%s1639 + $0x4c] sm:$0xf]
        %v1660 = vld [vmem:[%s1639 + $0x50] sm:$0xf]
        %v1661 = vld [vmem:[%s1639 + $0x54] sm:$0xf]
        %v1662 = vld [vmem:[%s1639 + $0x58] sm:$0xf]
        %v1663 = vld [vmem:[%s1639 + $0x5c] sm:$0xf]
        %s1664 = scalar_lea.vmem %s1, 12
        %v1665 = vld [vmem:[%s1664] sm:$0x3]
        %v1690 = vunpack.c.l.b16 %v1640
        %v1691 = vunpack.c.l.b16 %v1641
        %v1692 = vunpack.c.l.b16 %v1642
        %v1693 = vunpack.c.l.b16 %v1643
        %v1694 = vunpack.c.l.b16 %v1644
        %v1695 = vunpack.c.l.b16 %v1645
        %v1696 = vunpack.c.l.b16 %v1646
        %v1697 = vunpack.c.l.b16 %v1647
        %v1698 = vunpack.c.l.b16 %v1648
        %v1699 = vunpack.c.l.b16 %v1649
        %v1700 = vunpack.c.l.b16 %v1650
        %v1701 = vunpack.c.l.b16 %v1651
        %v1702 = vunpack.c.l.b16 %v1652
        %v1703 = vunpack.c.l.b16 %v1653
        %v1704 = vunpack.c.l.b16 %v1654
        %v1705 = vunpack.c.l.b16 %v1655
        %v1706 = vunpack.c.l.b16 %v1656
        %v1707 = vunpack.c.l.b16 %v1657
        %v1708 = vunpack.c.l.b16 %v1658
        %v1709 = vunpack.c.l.b16 %v1659
        %v1710 = vunpack.c.l.b16 %v1660
        %v1711 = vunpack.c.l.b16 %v1661
        %v1712 = vunpack.c.l.b16 %v1662
        %v1713 = vunpack.c.l.b16 %v1663
        %v1714 = vpack.c.b16 %v1691, %v1690
        %v1715 = vpack.c.b16 %v1693, %v1692
        %v1716 = vpack.c.b16 %v1695, %v1694
        %v1717 = vpack.c.b16 %v1697, %v1696
        %v1718 = vpack.c.b16 %v1699, %v1698
        %v1719 = vpack.c.b16 %v1701, %v1700
        %v1720 = vpack.c.b16 %v1703, %v1702
        %v1721 = vpack.c.b16 %v1705, %v1704
        %v1722 = vpack.c.b16 %v1707, %v1706
        %v1723 = vpack.c.b16 %v1709, %v1708
        %v1724 = vpack.c.b16 %v1711, %v1710
        %v1725 = vpack.c.b16 %v1713, %v1712
        %v1727 = vsel %vm636, %v1714, 0
        %v1730 = vsel %vm636, %v1715, 0
        %v1733 = vsel %vm636, %v1716, 0
        %v1736 = vsel %vm636, %v1717, 0
        %v1739 = vsel %vm636, %v1718, 0
        %v1742 = vsel %vm636, %v1719, 0
        %v1745 = vsel %vm636, %v1720, 0
        %v1748 = vsel %vm636, %v1721, 0
        %v1751 = vsel %vm636, %v1722, 0
        %v1754 = vsel %vm636, %v1723, 0
        %v1757 = vsel %vm636, %v1724, 0
        %v1760 = vsel %vm636, %v1725, 0
        %v1763 = vsel %vm673, %v1665, 0
        %1765 = vmatpush.bf16.msra.mxu0 0
        %1766 = vmatpush.bf16.msra.mxu0 0
        %1767 = vmatpush.bf16.msra.mxu0 0
        %1768 = vmatpush.bf16.msra.mxu0 0
        %1769 = vmatpush.bf16.msra.mxu0 0
        %1770 = vmatpush.bf16.msra.mxu0 0
        %1771 = vmatpush.bf16.msra.mxu0 0
        %1772 = vmatpush.bf16.msra.mxu0 %v1763
        %1773 = vmatmul.bf16.gmra.mxu0 %v1727
        %v1774 = vpop.f32.mrf.mxu0
        %v1775 = vadd.f32 0.0, %v1774
        %v1776 = vpop.f32.mrf.mxu0
        %v1777 = vadd.f32 0.0, %v1776
        %1778 = vmatmul.bf16.gmra.mxu0 %v1730
        %v1779 = vpop.f32.mrf.mxu0
        %v1780 = vpop.f32.mrf.mxu0
        %v1781 = vadd.f32 0.0, %v1780
        %1782 = vmatmul.bf16.gmra.mxu0 %v1733
        %v1783 = vpop.f32.mrf.mxu0
        %v1784 = vadd.f32 0.0, %v1783
        %v1785 = vpop.f32.mrf.mxu0
        %1786 = vmatmul.bf16.gmra.mxu0 %v1736
        %v1787 = vpop.f32.mrf.mxu0
        %v1788 = vadd.f32 0.0, %v1787
        %v1789 = vpop.f32.mrf.mxu0
        %v1790 = vadd.f32 0.0, %v1789
        %1791 = vmatmul.bf16.gmra.mxu0 %v1739
        %v1792 = vpop.f32.mrf.mxu0
        %v1793 = vpop.f32.mrf.mxu0
        %v1794 = vadd.f32 0.0, %v1793
        %1795 = vmatmul.bf16.gmra.mxu0 %v1742
        %v1796 = vpop.f32.mrf.mxu0
        %v1797 = vadd.f32 0.0, %v1796
        %v1798 = vpop.f32.mrf.mxu0
        %1799 = vmatmul.bf16.gmra.mxu0 %v1745
        %v1800 = vpop.f32.mrf.mxu0
        %v1801 = vadd.f32 0.0, %v1800
        %v1802 = vpop.f32.mrf.mxu0
        %v1803 = vadd.f32 0.0, %v1802
        %1804 = vmatmul.bf16.gmra.mxu0 %v1748
        %v1805 = vpop.f32.mrf.mxu0
        %v1806 = vpop.f32.mrf.mxu0
        %v1807 = vadd.f32 0.0, %v1806
        %1808 = vmatmul.bf16.gmra.mxu0 %v1751
        %v1809 = vpop.f32.mrf.mxu0
        %v1810 = vadd.f32 0.0, %v1809
        %v1811 = vpop.f32.mrf.mxu0
        %1812 = vmatmul.bf16.gmra.mxu0 %v1754
        %v1813 = vpop.f32.mrf.mxu0
        %v1814 = vadd.f32 0.0, %v1813
        %v1815 = vpop.f32.mrf.mxu0
        %v1816 = vadd.f32 0.0, %v1815
        %1817 = vmatmul.bf16.gmra.mxu0 %v1757
        %v1818 = vpop.f32.mrf.mxu0
        %v1819 = vpop.f32.mrf.mxu0
        %v1820 = vadd.f32 0.0, %v1819
        %1821 = vmatmul.bf16.gmra.mxu0 %v1760
        %v1822 = vpop.f32.mrf.mxu0
        %v1823 = vadd.f32 0.0, %v1822
        %v1824 = vpop.f32.mrf.mxu0
        %1825 = vdwg.mxu0
        %v1826 = vadd.f32 %v1623, %v1775
        %v1827 = vadd.f32 %v1624, %v1777
        %v1828 = vadd.f32 %v1625, %v1781
        %v1829 = vadd.f32 %v1626, %v1784
        %v1830 = vadd.f32 %v1627, %v1788
        %v1831 = vadd.f32 %v1628, %v1790
        %v1832 = vadd.f32 %v1629, %v1794
        %v1833 = vadd.f32 %v1630, %v1797
        %v1834 = vadd.f32 %v1631, %v1801
        %v1835 = vadd.f32 %v1632, %v1803
        %v1836 = vadd.f32 %v1633, %v1807
        %v1837 = vadd.f32 %v1634, %v1810
        %v1838 = vadd.f32 %v1635, %v1814
        %v1839 = vadd.f32 %v1636, %v1816
        %v1840 = vadd.f32 %v1637, %v1820
        %v1841 = vadd.f32 %v1638, %v1823
        %s1842 = scalar_lea.vmem %s1, 14
        %v1843 = vld [vmem:[%s1842] sm:$0x3]
        %v1845 = vsel %vm673, %v1843, 0
        %1847 = vmatpush.bf16.msra.mxu0 0
        %1848 = vmatpush.bf16.msra.mxu0 0
        %1849 = vmatpush.bf16.msra.mxu0 0
        %1850 = vmatpush.bf16.msra.mxu0 0
        %1851 = vmatpush.bf16.msra.mxu0 0
        %1852 = vmatpush.bf16.msra.mxu0 0
        %1853 = vmatpush.bf16.msra.mxu0 0
        %1854 = vmatpush.bf16.msra.mxu0 %v1845
        %1855 = vmatmul.bf16.gmra.mxu0 %v1727
        %v1856 = vpop.f32.mrf.mxu0
        %v1857 = vadd.f32 0.0, %v1856
        %v1858 = vpop.f32.mrf.mxu0
        %v1859 = vadd.f32 0.0, %v1858
        %1860 = vmatmul.bf16.gmra.mxu0 %v1730
        %v1861 = vpop.f32.mrf.mxu0
        %v1862 = vadd.f32 0.0, %v1861
        %v1863 = vpop.f32.mrf.mxu0
        %v1864 = vadd.f32 0.0, %v1863
        %1865 = vmatmul.bf16.gmra.mxu0 %v1733
        %v1866 = vpop.f32.mrf.mxu0
        %v1867 = vadd.f32 0.0, %v1866
        %v1868 = vpop.f32.mrf.mxu0
        %v1869 = vadd.f32 0.0, %v1868
        %1870 = vmatmul.bf16.gmra.mxu0 %v1736
        %v1871 = vpop.f32.mrf.mxu0
        %v1872 = vadd.f32 0.0, %v1871
        %v1873 = vpop.f32.mrf.mxu0
        %v1874 = vadd.f32 0.0, %v1873
        %1875 = vmatmul.bf16.gmra.mxu0 %v1739
        %v1876 = vpop.f32.mrf.mxu0
        %v1877 = vadd.f32 0.0, %v1876
        %v1878 = vpop.f32.mrf.mxu0
        %v1879 = vadd.f32 0.0, %v1878
        %1880 = vmatmul.bf16.gmra.mxu0 %v1742
        %v1881 = vpop.f32.mrf.mxu0
        %v1882 = vadd.f32 0.0, %v1881
        %v1883 = vpop.f32.mrf.mxu0
        %v1884 = vadd.f32 0.0, %v1883
        %1885 = vmatmul.bf16.gmra.mxu0 %v1745
        %v1886 = vpop.f32.mrf.mxu0
        %v1887 = vadd.f32 0.0, %v1886
        %v1888 = vpop.f32.mrf.mxu0
        %v1889 = vadd.f32 0.0, %v1888
        %1890 = vmatmul.bf16.gmra.mxu0 %v1748
        %v1891 = vpop.f32.mrf.mxu0
        %v1892 = vadd.f32 0.0, %v1891
        %v1893 = vpop.f32.mrf.mxu0
        %v1894 = vadd.f32 0.0, %v1893
        %1895 = vmatmul.bf16.gmra.mxu0 %v1751
        %v1896 = vpop.f32.mrf.mxu0
        %v1897 = vadd.f32 0.0, %v1896
        %v1898 = vpop.f32.mrf.mxu0
        %v1899 = vadd.f32 0.0, %v1898
        %1900 = vmatmul.bf16.gmra.mxu0 %v1754
        %v1901 = vpop.f32.mrf.mxu0
        %v1902 = vadd.f32 0.0, %v1901
        %v1903 = vpop.f32.mrf.mxu0
        %v1904 = vadd.f32 0.0, %v1903
        %1905 = vmatmul.bf16.gmra.mxu0 %v1757
        %v1906 = vpop.f32.mrf.mxu0
        %v1907 = vadd.f32 0.0, %v1906
        %v1908 = vpop.f32.mrf.mxu0
        %v1909 = vadd.f32 0.0, %v1908
        %1910 = vmatmul.bf16.gmra.mxu0 %v1760
        %v1911 = vpop.f32.mrf.mxu0
        %v1912 = vadd.f32 0.0, %v1911
        %v1913 = vpop.f32.mrf.mxu0
        %v1914 = vadd.f32 0.0, %v1913
        %1915 = vdwg.mxu0
        %v1940 = vrot.slane %v1857, 1
        %v1941 = vrot.slane %v1859, 1
        %v1942 = vsel %vm852, %v1940, %v1941
        %v1943 = vrot.slane %v1862, 1
        %v1944 = vsel %vm852, %v1941, %v1943
        %v1945 = vrot.slane %v1864, 1
        %v1946 = vrot.slane %v1867, 1
        %v1947 = vsel %vm852, %v1945, %v1946
        %v1948 = vrot.slane %v1869, 1
        %v1949 = vsel %vm852, %v1946, %v1948
        %v1950 = vrot.slane %v1872, 1
        %v1951 = vrot.slane %v1874, 1
        %v1952 = vsel %vm852, %v1950, %v1951
        %v1953 = vrot.slane %v1877, 1
        %v1954 = vsel %vm852, %v1951, %v1953
        %v1955 = vrot.slane %v1879, 1
        %v1956 = vrot.slane %v1882, 1
        %v1957 = vsel %vm852, %v1955, %v1956
        %v1958 = vrot.slane %v1884, 1
        %v1959 = vsel %vm852, %v1956, %v1958
        %v1960 = vrot.slane %v1887, 1
        %v1961 = vrot.slane %v1889, 1
        %v1962 = vsel %vm852, %v1960, %v1961
        %v1963 = vrot.slane %v1892, 1
        %v1964 = vsel %vm852, %v1961, %v1963
        %v1965 = vrot.slane %v1894, 1
        %v1966 = vrot.slane %v1897, 1
        %v1967 = vsel %vm852, %v1965, %v1966
        %v1968 = vrot.slane %v1899, 1
        %v1969 = vsel %vm852, %v1966, %v1968
        %v1970 = vrot.slane %v1902, 1
        %v1971 = vrot.slane %v1904, 1
        %v1972 = vsel %vm852, %v1970, %v1971
        %v1973 = vrot.slane %v1907, 1
        %v1974 = vsel %vm852, %v1971, %v1973
        %v1975 = vrot.slane %v1909, 1
        %v1976 = vrot.slane %v1912, 1
        %v1977 = vsel %vm852, %v1975, %v1976
        %v1978 = vrot.slane %v1914, 1
        %v1979 = vsel %vm852, %v1976, %v1978
        %v1996 = vadd.f32 %v1826, %v1942
        %v1997 = vadd.f32 %v1827, %v1944
        %v1998 = vadd.f32 %v1828, %v1947
        %v1999 = vadd.f32 %v1829, %v1949
        %v2000 = vadd.f32 %v1830, %v1952
        %v2001 = vadd.f32 %v1831, %v1954
        %v2002 = vadd.f32 %v1832, %v1957
        %v2003 = vadd.f32 %v1833, %v1959
        %v2004 = vadd.f32 %v1834, %v1962
        %v2005 = vadd.f32 %v1835, %v1964
        %v2006 = vadd.f32 %v1836, %v1967
        %v2007 = vadd.f32 %v1837, %v1969
        %v2008 = vadd.f32 %v1838, %v1972
        %v2009 = vadd.f32 %v1839, %v1974
        %v2010 = vadd.f32 %v1840, %v1977
        %v2011 = vadd.f32 %v1841, %v1979
        %s2012 = scalar_lea.vmem %s1, 16
        %v2013 = vld [vmem:[%s2012] sm:$0x3]
        %v2015 = vsel %vm673, %v2013, 0
        %2017 = vmatpush.bf16.msra.mxu0 0
        %2018 = vmatpush.bf16.msra.mxu0 0
        %2019 = vmatpush.bf16.msra.mxu0 0
        %2020 = vmatpush.bf16.msra.mxu0 0
        %2021 = vmatpush.bf16.msra.mxu0 0
        %2022 = vmatpush.bf16.msra.mxu0 0
        %2023 = vmatpush.bf16.msra.mxu0 0
        %2024 = vmatpush.bf16.msra.mxu0 %v2015
        %2025 = vmatmul.bf16.gmra.mxu0 %v1727
        %v2026 = vpop.f32.mrf.mxu0
        %v2027 = vadd.f32 0.0, %v2026
        %v2028 = vpop.f32.mrf.mxu0
        %v2029 = vadd.f32 0.0, %v2028
        %2030 = vmatmul.bf16.gmra.mxu0 %v1730
        %v2031 = vpop.f32.mrf.mxu0
        %v2032 = vadd.f32 0.0, %v2031
        %v2033 = vpop.f32.mrf.mxu0
        %v2034 = vadd.f32 0.0, %v2033
        %2035 = vmatmul.bf16.gmra.mxu0 %v1733
        %v2036 = vpop.f32.mrf.mxu0
        %v2037 = vadd.f32 0.0, %v2036
        %v2038 = vpop.f32.mrf.mxu0
        %v2039 = vadd.f32 0.0, %v2038
        %2040 = vmatmul.bf16.gmra.mxu0 %v1736
        %v2041 = vpop.f32.mrf.mxu0
        %v2042 = vadd.f32 0.0, %v2041
        %v2043 = vpop.f32.mrf.mxu0
        %v2044 = vadd.f32 0.0, %v2043
        %2045 = vmatmul.bf16.gmra.mxu0 %v1739
        %v2046 = vpop.f32.mrf.mxu0
        %v2047 = vadd.f32 0.0, %v2046
        %v2048 = vpop.f32.mrf.mxu0
        %v2049 = vadd.f32 0.0, %v2048
        %2050 = vmatmul.bf16.gmra.mxu0 %v1742
        %v2051 = vpop.f32.mrf.mxu0
        %v2052 = vadd.f32 0.0, %v2051
        %v2053 = vpop.f32.mrf.mxu0
        %v2054 = vadd.f32 0.0, %v2053
        %2055 = vmatmul.bf16.gmra.mxu0 %v1745
        %v2056 = vpop.f32.mrf.mxu0
        %v2057 = vadd.f32 0.0, %v2056
        %v2058 = vpop.f32.mrf.mxu0
        %v2059 = vadd.f32 0.0, %v2058
        %2060 = vmatmul.bf16.gmra.mxu0 %v1748
        %v2061 = vpop.f32.mrf.mxu0
        %v2062 = vadd.f32 0.0, %v2061
        %v2063 = vpop.f32.mrf.mxu0
        %v2064 = vadd.f32 0.0, %v2063
        %2065 = vmatmul.bf16.gmra.mxu0 %v1751
        %v2066 = vpop.f32.mrf.mxu0
        %v2067 = vadd.f32 0.0, %v2066
        %v2068 = vpop.f32.mrf.mxu0
        %v2069 = vadd.f32 0.0, %v2068
        %2070 = vmatmul.bf16.gmra.mxu0 %v1754
        %v2071 = vpop.f32.mrf.mxu0
        %v2072 = vadd.f32 0.0, %v2071
        %v2073 = vpop.f32.mrf.mxu0
        %v2074 = vadd.f32 0.0, %v2073
        %2075 = vmatmul.bf16.gmra.mxu0 %v1757
        %v2076 = vpop.f32.mrf.mxu0
        %v2077 = vadd.f32 0.0, %v2076
        %v2078 = vpop.f32.mrf.mxu0
        %v2079 = vadd.f32 0.0, %v2078
        %2080 = vmatmul.bf16.gmra.mxu0 %v1760
        %v2081 = vpop.f32.mrf.mxu0
        %v2082 = vadd.f32 0.0, %v2081
        %v2083 = vpop.f32.mrf.mxu0
        %v2084 = vadd.f32 0.0, %v2083
        %2085 = vdwg.mxu0
        %v2110 = vrot.slane %v2027, 2
        %v2111 = vrot.slane %v2029, 2
        %v2112 = vsel %vm1023, %v2110, %v2111
        %v2113 = vrot.slane %v2032, 2
        %v2114 = vsel %vm1023, %v2111, %v2113
        %v2115 = vrot.slane %v2034, 2
        %v2116 = vrot.slane %v2037, 2
        %v2117 = vsel %vm1023, %v2115, %v2116
        %v2118 = vrot.slane %v2039, 2
        %v2119 = vsel %vm1023, %v2116, %v2118
        %v2120 = vrot.slane %v2042, 2
        %v2121 = vrot.slane %v2044, 2
        %v2122 = vsel %vm1023, %v2120, %v2121
        %v2123 = vrot.slane %v2047, 2
        %v2124 = vsel %vm1023, %v2121, %v2123
        %v2125 = vrot.slane %v2049, 2
        %v2126 = vrot.slane %v2052, 2
        %v2127 = vsel %vm1023, %v2125, %v2126
        %v2128 = vrot.slane %v2054, 2
        %v2129 = vsel %vm1023, %v2126, %v2128
        %v2130 = vrot.slane %v2057, 2
        %v2131 = vrot.slane %v2059, 2
        %v2132 = vsel %vm1023, %v2130, %v2131
        %v2133 = vrot.slane %v2062, 2
        %v2134 = vsel %vm1023, %v2131, %v2133
        %v2135 = vrot.slane %v2064, 2
        %v2136 = vrot.slane %v2067, 2
        %v2137 = vsel %vm1023, %v2135, %v2136
        %v2138 = vrot.slane %v2069, 2
        %v2139 = vsel %vm1023, %v2136, %v2138
        %v2140 = vrot.slane %v2072, 2
        %v2141 = vrot.slane %v2074, 2
        %v2142 = vsel %vm1023, %v2140, %v2141
        %v2143 = vrot.slane %v2077, 2
        %v2144 = vsel %vm1023, %v2141, %v2143
        %v2145 = vrot.slane %v2079, 2
        %v2146 = vrot.slane %v2082, 2
        %v2147 = vsel %vm1023, %v2145, %v2146
        %v2148 = vrot.slane %v2084, 2
        %v2149 = vsel %vm1023, %v2146, %v2148
        %v2166 = vadd.f32 %v1996, %v2112
        %v2167 = vadd.f32 %v1997, %v2114
        %v2168 = vadd.f32 %v1998, %v2117
        %v2169 = vadd.f32 %v1999, %v2119
        %v2170 = vadd.f32 %v2000, %v2122
        %v2171 = vadd.f32 %v2001, %v2124
        %v2172 = vadd.f32 %v2002, %v2127
        %v2173 = vadd.f32 %v2003, %v2129
        %v2174 = vadd.f32 %v2004, %v2132
        %v2175 = vadd.f32 %v2005, %v2134
        %v2176 = vadd.f32 %v2006, %v2137
        %v2177 = vadd.f32 %v2007, %v2139
        %v2178 = vadd.f32 %v2008, %v2142
        %v2179 = vadd.f32 %v2009, %v2144
        %v2180 = vadd.f32 %v2010, %v2147
        %v2181 = vadd.f32 %v2011, %v2149
        %vm2182 = vcmask 64512
        %2183 = vst.msk [vmem:[%s540] sm:$0xff] %vm2182, %v2166
        %2184 = vst.msk [vmem:[%s540 + $0x8] sm:$0xff] %vm2182, %v2167
        %2185 = vst.msk [vmem:[%s540 + $0x10] sm:$0xff] %vm2182, %v2168
        %2186 = vst.msk [vmem:[%s540 + $0x18] sm:$0xff] %vm2182, %v2169
        %2187 = vst.msk [vmem:[%s540 + $0x20] sm:$0xff] %vm2182, %v2170
        %2188 = vst.msk [vmem:[%s540 + $0x28] sm:$0xff] %vm2182, %v2171
        %2189 = vst.msk [vmem:[%s540 + $0x30] sm:$0xff] %vm2182, %v2172
        %2190 = vst.msk [vmem:[%s540 + $0x38] sm:$0xff] %vm2182, %v2173
        %2191 = vst.msk [vmem:[%s540 + $0x40] sm:$0xff] %vm2182, %v2174
        %2192 = vst.msk [vmem:[%s540 + $0x48] sm:$0xff] %vm2182, %v2175
        %2193 = vst.msk [vmem:[%s540 + $0x50] sm:$0xff] %vm2182, %v2176
        %2194 = vst.msk [vmem:[%s540 + $0x58] sm:$0xff] %vm2182, %v2177
        %2195 = vst.msk [vmem:[%s540 + $0x60] sm:$0xff] %vm2182, %v2178
        %2196 = vst.msk [vmem:[%s540 + $0x68] sm:$0xff] %vm2182, %v2179
        %2197 = vst.msk [vmem:[%s540 + $0x70] sm:$0xff] %vm2182, %v2180
        %2198 = vst.msk [vmem:[%s540 + $0x78] sm:$0xff] %vm2182, %v2181
        %v2199 = vsel %vm2182, %v2166, 0.0
        %v2200 = vsel %vm2182, %v2167, 0.0
        %v2201 = vadd.f32 %v2199, %v2200
        %v2202 = vsel %vm2182, %v2168, 0.0
        %v2203 = vadd.f32 %v2201, %v2202
        %v2204 = vsel %vm2182, %v2169, 0.0
        %v2205 = vadd.f32 %v2203, %v2204
        %v2206 = vsel %vm2182, %v2170, 0.0
        %v2207 = vadd.f32 %v2205, %v2206
        %v2208 = vsel %vm2182, %v2171, 0.0
        %v2209 = vadd.f32 %v2207, %v2208
        %v2210 = vsel %vm2182, %v2172, 0.0
        %v2211 = vadd.f32 %v2209, %v2210
        %v2212 = vsel %vm2182, %v2173, 0.0
        %v2213 = vadd.f32 %v2211, %v2212
        %v2214 = vsel %vm2182, %v2174, 0.0
        %v2215 = vadd.f32 %v2213, %v2214
        %v2216 = vsel %vm2182, %v2175, 0.0
        %v2217 = vadd.f32 %v2215, %v2216
        %v2218 = vsel %vm2182, %v2176, 0.0
        %v2219 = vadd.f32 %v2217, %v2218
        %v2220 = vsel %vm2182, %v2177, 0.0
        %v2221 = vadd.f32 %v2219, %v2220
        %v2222 = vsel %vm2182, %v2178, 0.0
        %v2223 = vadd.f32 %v2221, %v2222
        %v2224 = vsel %vm2182, %v2179, 0.0
        %v2225 = vadd.f32 %v2223, %v2224
        %v2226 = vsel %vm2182, %v2180, 0.0
        %v2227 = vadd.f32 %v2225, %v2226
        %v2228 = vsel %vm2182, %v2181, 0.0
        %v2229 = vadd.f32 %v2227, %v2228
        %v2230 = vrot.slane %v2229, 4
        %v2231 = vadd.f32 %v2229, %v2230
        %v2232 = vrot.slane %v2231, 2
        %v2233 = vadd.f32 %v2231, %v2232
        %v2234 = vrot.slane %v2233, 1
        %v2235 = vadd.f32 %v2233, %v2234
        %v2236 = vmul.f32 %v2166, %v2166
        %v2237 = vmul.f32 %v2167, %v2167
        %v2238 = vmul.f32 %v2168, %v2168
        %v2239 = vmul.f32 %v2169, %v2169
        %v2240 = vmul.f32 %v2170, %v2170
        %v2241 = vmul.f32 %v2171, %v2171
        %v2242 = vmul.f32 %v2172, %v2172
        %v2243 = vmul.f32 %v2173, %v2173
        %v2244 = vmul.f32 %v2174, %v2174
        %v2245 = vmul.f32 %v2175, %v2175
        %v2246 = vmul.f32 %v2176, %v2176
        %v2247 = vmul.f32 %v2177, %v2177
        %v2248 = vmul.f32 %v2178, %v2178
        %v2249 = vmul.f32 %v2179, %v2179
        %v2250 = vmul.f32 %v2180, %v2180
        %v2251 = vmul.f32 %v2181, %v2181
        %v2252 = vsel %vm2182, %v2236, 0.0
        %v2253 = vsel %vm2182, %v2237, 0.0
        %v2254 = vadd.f32 %v2252, %v2253
        %v2255 = vsel %vm2182, %v2238, 0.0
        %v2256 = vadd.f32 %v2254, %v2255
        %v2257 = vsel %vm2182, %v2239, 0.0
        %v2258 = vadd.f32 %v2256, %v2257
        %v2259 = vsel %vm2182, %v2240, 0.0
        %v2260 = vadd.f32 %v2258, %v2259
        %v2261 = vsel %vm2182, %v2241, 0.0
        %v2262 = vadd.f32 %v2260, %v2261
        %v2263 = vsel %vm2182, %v2242, 0.0
        %v2264 = vadd.f32 %v2262, %v2263
        %v2265 = vsel %vm2182, %v2243, 0.0
        %v2266 = vadd.f32 %v2264, %v2265
        %v2267 = vsel %vm2182, %v2244, 0.0
        %v2268 = vadd.f32 %v2266, %v2267
        %v2269 = vsel %vm2182, %v2245, 0.0
        %v2270 = vadd.f32 %v2268, %v2269
        %v2271 = vsel %vm2182, %v2246, 0.0
        %v2272 = vadd.f32 %v2270, %v2271
        %v2273 = vsel %vm2182, %v2247, 0.0
        %v2274 = vadd.f32 %v2272, %v2273
        %v2275 = vsel %vm2182, %v2248, 0.0
        %v2276 = vadd.f32 %v2274, %v2275
        %v2277 = vsel %vm2182, %v2249, 0.0
        %v2278 = vadd.f32 %v2276, %v2277
        %v2279 = vsel %vm2182, %v2250, 0.0
        %v2280 = vadd.f32 %v2278, %v2279
        %v2281 = vsel %vm2182, %v2251, 0.0
        %v2282 = vadd.f32 %v2280, %v2281
        %v2283 = vrot.slane %v2282, 4
        %v2284 = vadd.f32 %v2282, %v2283
        %v2285 = vrot.slane %v2284, 2
        %v2286 = vadd.f32 %v2284, %v2285
        %v2287 = vrot.slane %v2286, 1
        %v2288 = vadd.f32 %v2286, %v2287
        %vm2289 = vcmask 57344
        %2290 = vst.msk [vmem:[%s549] sm:$0x1] %vm2289, %v2235
        %2291 = vst.msk [vmem:[%s549 + $0x1] sm:$0x1] %vm2289, %v2288
        %s2292 = smul.u32 8, %s20
        %p2293 = scmp.lt.s32.totalorder %s19, 1
        %s2294 = scalar_select %p2293, %s19, 1
        %p2295 = scmp.lt.s32.totalorder %s2292, 15
        %s2296 = scalar_select %p2295, %s2292, 15
        %s2297 = smul.addr %s2296, 2
        %s2298 = smul.addr %s2294, 32
        %s2299 = sadd.s32 %s2297, %s2298
        %s2300 = smul.addr %s2299, 8
        %s2301 = scalar_lea.vmem %s2, %s2300
        %p2302 = scmp.lt.s32.totalorder %s19, 1
        %s2303 = scalar_select %p2302, %s19, 1
        %p2304 = scmp.lt.s32.totalorder %s20, 1
        %s2305 = scalar_select %p2304, %s20, 1
        %s2306 = smul.addr %s2303, 2
        %s2307 = sadd.s32 %s2305, %s2306
        %s2308 = smul.addr %s2307, 2
        %s2309 = scalar_lea.vmem %s3, %s2308
        // Predicated region
        $region70: #{conv_block_forward.2} parent=64 // pred_check
          %p2310 = pneg %p96
        $region71: #{conv_block_forward.2} parent=64 // pred_check_branch
          %2312 = sbr.rel (%p2310) target = $region73
        $region72: #{conv_block_forward.2} parent=64 // pred_region
          %s2313 = smul.u32 8, %s20
        $region73: #{conv_block_forward.2} parent=64 // pred_fallthru
          _
        // Predicated region
        $region74: #{conv_block_forward.2} parent=64 // pred_check
          %p2314 = pneg %p124
        $region75: #{conv_block_forward.2} parent=64 // pred_check_branch
          %2316 = sbr.rel (%p2314) target = $region77
        $region76: #{conv_block_forward.2} parent=64 // pred_region
          _
        $region77: #{conv_block_forward.2} parent=64 // pred_fallthru
          _
      $region65: #{conv_block_forward.2} parent=5 // pred_fallthru
        _
      %p2317 = scmp.le.s32.totalorder 2, %s10
      // Predicated region
      $region78: #{conv_block_forward.2} parent=5 // pred_check
        %p2318 = pneg %p2317
      $region79: #{conv_block_forward.2} parent=5 // pred_check_branch
        %2320 = sbr.rel (%p2318) target = $region81
      $region80: #{conv_block_forward.2} parent=5 // pred_region
        %s2321 = ssub.s32 %s10, 2
        // Predicated region
        $region82: #{conv_block_forward.2} parent=80 // pred_check
          %p2322 = pneg %p102
        $region83: #{conv_block_forward.2} parent=80 // pred_check_branch
          %2324 = sbr.rel (%p2322) target = $region85
        $region84: #{conv_block_forward.2} parent=80 // pred_region
          %s2325 = smul.u32 8, %s22
          %p2326 = scmp.lt.s32.totalorder %s21, 1
          %s2327 = scalar_select %p2326, %s21, 1
          %p2328 = scmp.lt.s32.totalorder %s2325, 15
          %s2329 = scalar_select %p2328, %s2325, 15
          %s2330 = smul.addr %s2329, 2
          %s2331 = smul.addr %s2327, 32
          %s2332 = sadd.s32 %s2330, %s2331
          %s2333 = smul.addr %s2332, 8
          %s2334 = scalar_lea.vmem %s2, %s2333
        $region85: #{conv_block_forward.2} parent=80 // pred_fallthru
          _
        // Predicated region
        $region86: #{conv_block_forward.2} parent=80 // pred_check
          %p2335 = pneg %p130
        $region87: #{conv_block_forward.2} parent=80 // pred_check_branch
          %2337 = sbr.rel (%p2335) target = $region89
        $region88: #{conv_block_forward.2} parent=80 // pred_region
          %p2338 = scmp.lt.s32.totalorder %s21, 1
          %s2339 = scalar_select %p2338, %s21, 1
          %p2340 = scmp.lt.s32.totalorder %s22, 1
          %s2341 = scalar_select %p2340, %s22, 1
          %s2342 = smul.addr %s2339, 2
          %s2343 = sadd.s32 %s2341, %s2342
          %s2344 = smul.addr %s2343, 2
          %s2345 = scalar_lea.vmem %s3, %s2344
        $region89: #{conv_block_forward.2} parent=80 // pred_fallthru
          _
      $region81: #{conv_block_forward.2} parent=5 // pred_fallthru
        _
    $region6: #{conv_block_forward.2} parent=1 // loop_footer
      %s14 = sadd.s32 1, %s10
    $region7: #{conv_block_forward.2} parent=1 // loop_footer_branch
      %9 = sbr.rel target = $region3
    $region8: #{conv_block_forward.2} parent=1 // loop_exit
      _

</llo_original>
